<compile_context>
chip_gen: v5e
topology: v5e:2x2
jax: 0.10.0
libtpu: 0.0.40
codegen_flags: <defaults>
</compile_context>

<pallas_src>
import functools

import numpy as np
import jax
import jax.numpy as jnp
from jax.experimental import pallas as pl
from jax.experimental.pallas import tpu as pltpu


# --------------------- host-side constant selection matrices ---------------------

def _toeplitz(k, in_w, out_w):
    """t[kk, x + kk, x] = 1 : scatters a length-k filter tap into an (in_w, out_w) band."""
    t = np.zeros((k, in_w, out_w), np.float32)
    for kk in range(k):
        for x in range(out_w):
            t[kk, x + kk, x] = 1.0
    return t


def _col_sel(n_ch, out_w, in_w):
    """s[r, c*in_w + 2j + r, c*out_w + j] = 1 : picks pooling col-phase r per channel band."""
    s = np.zeros((2, n_ch * in_w, n_ch * out_w), np.float32)
    for r in range(2):
        for c in range(n_ch):
            for j in range(out_w):
                s[r, c * in_w + 2 * j + r, c * out_w + j] = 1.0
    return s


# --------------------------- one-time weight re-layout ---------------------------

def prepare_params(params):
    """Re-pack PyTorch-layout weights into kernel-ready, lane-friendly bf16 matrices."""
    f32, bf16 = jnp.float32, jnp.bfloat16

    # conv1: (6,1,5,5) -> 5 stacked (32, 6*28) matrices; lane = oc*28 + ox.
    w1c = params["conv1_w"][:, 0, :, :].astype(f32)                       # (oc, dy, kx)
    t1 = jnp.asarray(_toeplitz(5, 32, 28))
    w1 = jnp.einsum("cdk,kix->dicx", w1c, t1).reshape(5, 32, 6 * 28).astype(bf16)
    # pooled-lane bias (lane = oc*14 + j), added AFTER the column-phase pooling.
    b1 = jnp.repeat(params["conv1_b"].astype(f32), 14).reshape(1, 6 * 14)

    # conv2: (16,6,5,5) -> 5 stacked (6*14, 16*10); row = ci*14 + i, lane = co*10 + ox.
    w2c = params["conv2_w"].astype(f32)                                   # (co, ci, dy, kx)
    t2 = jnp.asarray(_toeplitz(5, 14, 10))
    w2 = jnp.einsum("acdk,kix->dciax", w2c, t2).reshape(5, 6 * 14, 16 * 10).astype(bf16)
    b2 = jnp.repeat(params["conv2_b"].astype(f32), 5).reshape(1, 16 * 5)  # pooled lanes

    # fc1: fold the PyTorch (c,h,w) flatten order into 5 per-row (h) weight blocks over
    # the kernel's (c*5 + w) lane order; pad 120 -> 128 outputs.
    wf1 = params["fc1_w"].astype(f32).reshape(120, 16, 5, 5)              # (n, c, h, w)
    wf1 = wf1.transpose(2, 1, 3, 0).reshape(5, 80, 120)                   # (h, c*5+w, n)
    wf1 = jnp.pad(wf1, ((0, 0), (0, 0), (0, 8))).astype(bf16)
    bf1 = jnp.pad(params["fc1_b"].astype(f32), (0, 8)).reshape(1, 128)

    wf2 = jnp.pad(params["fc2_w"].astype(f32).T, ((0, 8), (0, 44))).astype(bf16)    # (128,128)
    bf2 = jnp.pad(params["fc2_b"].astype(f32), (0, 44)).reshape(1, 128)
    wf3 = jnp.pad(params["fc3_w"].astype(f32).T, ((0, 44), (0, 118))).astype(bf16)  # (128,128)
    bf3 = jnp.pad(params["fc3_b"].astype(f32), (0, 118)).reshape(1, 128)

    return {
        "w1": w1, "b1": b1, "s1c": jnp.asarray(_col_sel(6, 14, 28)).astype(bf16),
        "w2": w2, "b2": b2, "s2c": jnp.asarray(_col_sel(16, 5, 10)).astype(bf16),
        "wf1": wf1, "bf1": bf1, "wf2": wf2, "bf2": bf2, "wf3": wf3, "bf3": bf3,
    }


# ---------------------------------- Pallas kernel ---------------------------------

def _lenet5_kernel(x_ref, w1_ref, b1_ref, s1c_ref, w2_ref, b2_ref, s2c_ref,
                   wf1_ref, bf1_ref, wf2_ref, bf2_ref, wf3_ref, bf3_ref,
                   o_ref, xs_ref, q1_ref, q2_ref, *, tb, sc):
    f32, bf16 = jnp.float32, jnp.bfloat16
    ng = tb // sc              # sample groups per tile
    r1 = sc * 32               # conv1 slab rows per group (32 padded input rows / sample)
    r2 = sc * 16               # conv2 slab rows per group (16-row bands / sample)
    R1 = tb * 32

    # Stage 0: stage the input slab into a tail-padded scratch so the 5 row-shifted
    # reads below never leave the buffer; zero the pad tails (garbage rows only).
    xs_ref[pl.ds(0, R1), :] = x_ref[...]
    xs_ref[pl.ds(R1, 8), :] = jnp.zeros((8, 32), f32)
    q1_ref[pl.ds(R1, 8), :] = jnp.zeros((8, 84), f32)

    b1 = b1_ref[...]
    b2 = b2_ref[...]
    s1e, s1o = s1c_ref[0], s1c_ref[1]
    s2e, s2o = s2c_ref[0], s2c_ref[1]

    # ---- conv1 + 2x2 max-pool (column phase) + relu, per sample group -------------
    # 5 shifted slab matmuls, bf16 x bf16 -> f32; rows 28..31 of each 32-row band are
    # garbage and never read back for valid outputs.
    for g in range(ng):
        base = g * r1
        h = jnp.dot(xs_ref[pl.ds(base, r1), :].astype(bf16), w1_ref[0],
                    preferred_element_type=f32)
        for d in range(1, 5):
            h = h + jnp.dot(xs_ref[pl.ds(base + d, r1), :].astype(bf16), w1_ref[d],
                            preferred_element_type=f32)
        hb = h.astype(bf16)
        p = jnp.maximum(jnp.dot(hb, s1e, preferred_element_type=f32),
                        jnp.dot(hb, s1o, preferred_element_type=f32))
        q1_ref[pl.ds(base, r1), :] = jnp.maximum(p + b1, 0.0)

    # ---- conv2 + 2x2 max-pool (column phase) + relu --------------------------------
    # The pool1 ROW phase is folded into the stride-2 sublane reads of q1: operand for
    # shift d, sample s, output row y is max(q1[s, 2(y+d)], q1[s, 2(y+d)+1]).
    for g in range(ng):
        h2 = None
        for d in range(5):
            a = q1_ref[pl.ds(g * r1 + 2 * d, r2, stride=2), :]
            b = q1_ref[pl.ds(g * r1 + 2 * d + 1, r2, stride=2), :]
            t = jnp.dot(jnp.maximum(a, b).astype(bf16), w2_ref[d],
                        preferred_element_type=f32)
            h2 = t if h2 is None else h2 + t
        hb2 = h2.astype(bf16)
        p = jnp.maximum(jnp.dot(hb2, s2e, preferred_element_type=f32),
                        jnp.dot(hb2, s2o, preferred_element_type=f32))
        q2_ref[pl.ds(g * r2, r2), :] = jnp.maximum(p + b2, 0.0)

    # ---- fc1 / fc2 / fc3, fully batched over the tile ------------------------------
    # The pool2 ROW phase is folded into stride-16 sublane reads of q2 (row h of every
    # sample's 16-row band), giving (tb, 80) operands for 5 per-row fc1 weight blocks.
    f1 = None
    for hh in range(5):
        a = q2_ref[pl.ds(2 * hh, tb, stride=16), :]
        b = q2_ref[pl.ds(2 * hh + 1, tb, stride=16), :]
        t = jnp.dot(jnp.maximum(a, b).astype(bf16), wf1_ref[hh],
                    preferred_element_type=f32)
        f1 = t if f1 is None else f1 + t
    f1 = jnp.maximum(f1 + bf1_ref[...], 0.0).astype(bf16)
    f2 = jnp.maximum(jnp.dot(f1, wf2_ref[...], preferred_element_type=f32) + bf2_ref[...],
                     0.0).astype(bf16)
    f3 = jnp.dot(f2, wf3_ref[...], preferred_element_type=f32) + bf3_ref[...]

    o_ref[...] = f3.astype(o_ref.dtype)          # one dense (tb, 128) store per step


# ----------------------------------- host wrapper ----------------------------------

def lenet5_forward(x, prep, *, tb=64):
    """x: (B, 1, 28, 28) float32, prep = prepare_params(raw_params). Returns (B, 10)."""
    B = x.shape[0]
    # Single channel; pad spatially by 2 (conv1 padding) once on the host.
    xp = jnp.pad(x.reshape(B, 28, 28).astype(jnp.float32), ((0, 0), (2, 2), (2, 2)))

    if B <= tb:
        tb = B                               # single tile == full (possibly tiny) batch
    else:
        tb = max(8, (tb // 8) * 8)           # multi-tile: keep sublane-aligned tiles
    bp = ((B + tb - 1) // tb) * tb
    if bp != B:
        xp = jnp.pad(xp, ((0, bp - B), (0, 0), (0, 0)))
    xs2d = xp.reshape(bp * 32, 32)           # row-slab layout: sample s = rows [32s, 32s+32)
    sc = 8 if tb % 8 == 0 else tb            # samples per in-kernel group (conv M = 256)
    grid = (bp // tb,)

    def _resident(arr):
        nd = arr.ndim

        def index_map(i, _nd=nd):
            return (0,) * _nd

        return pl.BlockSpec(arr.shape, index_map)

    names = ["w1", "b1", "s1c", "w2", "b2", "s2c",
             "wf1", "bf1", "wf2", "bf2", "wf3", "bf3"]
    kernel = functools.partial(_lenet5_kernel, tb=tb, sc=sc)

    out = pl.pallas_call(
        kernel,
        out_shape=jax.ShapeDtypeStruct((bp, 128), jnp.float32),
        grid=grid,
        in_specs=[pl.BlockSpec((tb * 32, 32), lambda i: (i, 0))]
                 + [_resident(prep[n]) for n in names],
        out_specs=pl.BlockSpec((tb, 128), lambda i: (i, 0)),
        scratch_shapes=[
            pltpu.VMEM((tb * 32 + 8, 32), jnp.float32),   # xs: tail-padded input slab
            pltpu.VMEM((tb * 32 + 8, 84), jnp.float32),   # q1: conv1 col-pooled + relu
            pltpu.VMEM((tb * 16, 80), jnp.float32),       # q2: conv2 col-pooled + relu
        ],
        compiler_params=pltpu.CompilerParams(
            dimension_semantics=("parallel",)),
    )(xs2d, *[prep[n] for n in names])

    return out[:B, :10]


# ---------------------------- pure-JAX reference (check) ----------------------------

def lenet5_reference(x, params):
    hi = jax.lax.Precision.HIGHEST
    h = jax.lax.conv_general_dilated(
        x, params["conv1_w"], window_strides=(1, 1), padding=((2, 2), (2, 2)),
        dimension_numbers=("NCHW", "OIHW", "NCHW"), precision=hi)
    h = jax.nn.relu(h + params["conv1_b"][None, :, None, None])
    h = jax.lax.reduce_window(h, -jnp.inf, jax.lax.max, (1, 1, 2, 2), (1, 1, 2, 2), "VALID")
    h = jax.lax.conv_general_dilated(
        h, params["conv2_w"], window_strides=(1, 1), padding="VALID",
        dimension_numbers=("NCHW", "OIHW", "NCHW"), precision=hi)
    h = jax.nn.relu(h + params["conv2_b"][None, :, None, None])
    h = jax.lax.reduce_window(h, -jnp.inf, jax.lax.max, (1, 1, 2, 2), (1, 1, 2, 2), "VALID")
    h = h.reshape(h.shape[0], -1)                                         # NCHW flatten = torch .view
    h = jax.nn.relu(jnp.dot(h, params["fc1_w"].T, precision=hi) + params["fc1_b"])
    h = jax.nn.relu(jnp.dot(h, params["fc2_w"].T, precision=hi) + params["fc2_b"])
    return jnp.dot(h, params["fc3_w"].T, precision=hi) + params["fc3_b"]


def init_params(key):
    ks = jax.random.split(key, 10)

    def w(k, shape, scale=0.1):
        return (scale * jax.random.normal(k, shape)).astype(jnp.float32)

    return {
        "conv1_w": w(ks[0], (6, 1, 5, 5)),
        "conv1_b": w(ks[1], (6,)),
        "conv2_w": w(ks[2], (16, 6, 5, 5)),
        "conv2_b": w(ks[3], (16,)),
        "fc1_w":   w(ks[4], (120, 16 * 5 * 5)),   # PyTorch Linear: (out, in)
        "fc1_b":   w(ks[5], (120,)),
        "fc2_w":   w(ks[6], (84, 120)),
        "fc2_b":   w(ks[7], (84,)),
        "fc3_w":   w(ks[8], (10, 84)),
        "fc3_b":   w(ks[9], (10,)),
    }


if __name__ == "__main__":
    key = jax.random.PRNGKey(0)
    k_param, k_x = jax.random.split(key)
    params = init_params(k_param)
    prep = prepare_params(params)                 # one-time weight re-layout (bf16)

    # Small smoke test (batch 2, single tile).
    x = jax.random.normal(k_x, (2, 1, 28, 28), dtype=jnp.float32)
    out = jax.block_until_ready(jax.jit(lenet5_forward)(x, prep))
    ref = jax.block_until_ready(lenet5_reference(x, params))
    assert out.shape == (2, 10) and out.dtype == jnp.float32
    assert jnp.allclose(out, ref, atol=5e-2, rtol=5e-2)

    # Batched test exercising multi-tile grid, multi-group conv slabs and batch padding.
    x_big = jax.random.normal(jax.random.PRNGKey(1), (40, 1, 28, 28), dtype=jnp.float32)
    fwd16 = jax.jit(functools.partial(lenet5_forward, tb=16))
    out_big = jax.block_until_ready(fwd16(x_big, prep))
    ref_big = jax.block_until_ready(lenet5_reference(x_big, params))
    assert out_big.shape == (40, 10)
    assert jnp.allclose(out_big, ref_big, atol=5e-2, rtol=5e-2)

    print("KERNEL_OK")
</pallas_src>

<mosaic_0001>
module attributes {stable_mosaic.version = 11 : i64} {
  func.func @_lenet5_kernel(%arg0: i32, %arg1: memref<64x32xf32, #tpu.memory_space<vmem>>, %arg2: memref<5x32x168xbf16, #tpu.memory_space<vmem>>, %arg3: memref<1x84xf32, #tpu.memory_space<vmem>>, %arg4: memref<2x168x84xbf16, #tpu.memory_space<vmem>>, %arg5: memref<5x84x160xbf16, #tpu.memory_space<vmem>>, %arg6: memref<1x80xf32, #tpu.memory_space<vmem>>, %arg7: memref<2x160x80xbf16, #tpu.memory_space<vmem>>, %arg8: memref<5x80x128xbf16, #tpu.memory_space<vmem>>, %arg9: memref<1x128xf32, #tpu.memory_space<vmem>>, %arg10: memref<128x128xbf16, #tpu.memory_space<vmem>>, %arg11: memref<1x128xf32, #tpu.memory_space<vmem>>, %arg12: memref<128x128xbf16, #tpu.memory_space<vmem>>, %arg13: memref<1x128xf32, #tpu.memory_space<vmem>>, %arg14: memref<2x128xf32, #tpu.memory_space<vmem>>, %arg15: memref<72x32xf32, #tpu.memory_space<vmem>>, %arg16: memref<72x84xf32, #tpu.memory_space<vmem>>, %arg17: memref<32x80xf32, #tpu.memory_space<vmem>>) attributes {dimension_semantics = [#tpu.dimension_semantics<parallel>], iteration_bounds = array<i64: 1>, scalar_prefetch = 0 : i64, scratch_operands = 3 : i64, tpu.core_type = #tpu.core_type<tc>, window_params = [{transform_indices = @transform_0, window_bounds = array<i64: 64, 32>}, {pipeline_mode = #tpu.pipeline_mode<synchronous>, transform_indices = @transform_1, window_bounds = array<i64: 5, 32, 168>}, {pipeline_mode = #tpu.pipeline_mode<synchronous>, transform_indices = @transform_2, window_bounds = array<i64: 1, 84>}, {pipeline_mode = #tpu.pipeline_mode<synchronous>, transform_indices = @transform_3, window_bounds = array<i64: 2, 168, 84>}, {pipeline_mode = #tpu.pipeline_mode<synchronous>, transform_indices = @transform_4, window_bounds = array<i64: 5, 84, 160>}, {pipeline_mode = #tpu.pipeline_mode<synchronous>, transform_indices = @transform_5, window_bounds = array<i64: 1, 80>}, {pipeline_mode = #tpu.pipeline_mode<synchronous>, transform_indices = @transform_6, window_bounds = array<i64: 2, 160, 80>}, {pipeline_mode = #tpu.pipeline_mode<synchronous>, transform_indices = @transform_7, window_bounds = array<i64: 5, 80, 128>}, {pipeline_mode = #tpu.pipeline_mode<synchronous>, transform_indices = @transform_8, window_bounds = array<i64: 1, 128>}, {pipeline_mode = #tpu.pipeline_mode<synchronous>, transform_indices = @transform_9, window_bounds = array<i64: 128, 128>}, {pipeline_mode = #tpu.pipeline_mode<synchronous>, transform_indices = @transform_10, window_bounds = array<i64: 1, 128>}, {pipeline_mode = #tpu.pipeline_mode<synchronous>, transform_indices = @transform_11, window_bounds = array<i64: 128, 128>}, {pipeline_mode = #tpu.pipeline_mode<synchronous>, transform_indices = @transform_12, window_bounds = array<i64: 1, 128>}, {transform_indices = @transform_13, window_bounds = array<i64: 2, 128>}]} {
    %c0 = arith.constant 0 : index
    %c0_0 = arith.constant 0 : index
    %0 = vector.load %arg1[%c0, %c0_0] : memref<64x32xf32, #tpu.memory_space<vmem>>, vector<64x32xf32>
    %c0_1 = arith.constant 0 : index
    %c0_2 = arith.constant 0 : index
    %1 = vector.load %arg15[%c0_1, %c0_2] : memref<72x32xf32, #tpu.memory_space<vmem>>, vector<64x32xf32>
    tpu.vector_store %arg15[%c0_1, %c0_2], %0 {strides = array<i32>} : memref<72x32xf32, #tpu.memory_space<vmem>>, vector<64x32xf32>,
    %cst = arith.constant 0.000000e+00 : f32
    %2 = vector.broadcast %cst : f32 to vector<8x32xf32>
    %c64 = arith.constant 64 : index
    %c0_3 = arith.constant 0 : index
    %3 = vector.load %arg15[%c64, %c0_3] : memref<72x32xf32, #tpu.memory_space<vmem>>, vector<8x32xf32>
    tpu.vector_store %arg15[%c64, %c0_3], %2 {strides = array<i32>} : memref<72x32xf32, #tpu.memory_space<vmem>>, vector<8x32xf32>,
    %cst_4 = arith.constant 0.000000e+00 : f32
    %4 = vector.broadcast %cst_4 : f32 to vector<8x84xf32>
    %c64_5 = arith.constant 64 : index
    %c0_6 = arith.constant 0 : index
    %5 = vector.load %arg16[%c64_5, %c0_6] : memref<72x84xf32, #tpu.memory_space<vmem>>, vector<8x84xf32>
    tpu.vector_store %arg16[%c64_5, %c0_6], %4 {strides = array<i32>} : memref<72x84xf32, #tpu.memory_space<vmem>>, vector<8x84xf32>,
    %c0_7 = arith.constant 0 : index
    %c0_8 = arith.constant 0 : index
    %6 = vector.load %arg3[%c0_7, %c0_8] : memref<1x84xf32, #tpu.memory_space<vmem>>, vector<1x84xf32>
    %c0_9 = arith.constant 0 : index
    %c0_10 = arith.constant 0 : index
    %7 = vector.load %arg6[%c0_9, %c0_10] : memref<1x80xf32, #tpu.memory_space<vmem>>, vector<1x80xf32>
    %c0_11 = arith.constant 0 : index
    %c0_12 = arith.constant 0 : index
    %c0_13 = arith.constant 0 : index
    %8 = vector.load %arg4[%c0_11, %c0_12, %c0_13] : memref<2x168x84xbf16, #tpu.memory_space<vmem>>, vector<1x168x84xbf16>
    %9 = vector.shape_cast %8 : vector<1x168x84xbf16> to vector<168x84xbf16>
    %c1 = arith.constant 1 : index
    %c0_14 = arith.constant 0 : index
    %c0_15 = arith.constant 0 : index
    %10 = vector.load %arg4[%c1, %c0_14, %c0_15] : memref<2x168x84xbf16, #tpu.memory_space<vmem>>, vector<1x168x84xbf16>
    %11 = vector.shape_cast %10 : vector<1x168x84xbf16> to vector<168x84xbf16>
    %c0_16 = arith.constant 0 : index
    %c0_17 = arith.constant 0 : index
    %c0_18 = arith.constant 0 : index
    %12 = vector.load %arg7[%c0_16, %c0_17, %c0_18] : memref<2x160x80xbf16, #tpu.memory_space<vmem>>, vector<1x160x80xbf16>
    %13 = vector.shape_cast %12 : vector<1x160x80xbf16> to vector<160x80xbf16>
    %c1_19 = arith.constant 1 : index
    %c0_20 = arith.constant 0 : index
    %c0_21 = arith.constant 0 : index
    %14 = vector.load %arg7[%c1_19, %c0_20, %c0_21] : memref<2x160x80xbf16, #tpu.memory_space<vmem>>, vector<1x160x80xbf16>
    %15 = vector.shape_cast %14 : vector<1x160x80xbf16> to vector<160x80xbf16>
    %c0_22 = arith.constant 0 : index
    %c0_23 = arith.constant 0 : index
    %16 = vector.load %arg15[%c0_22, %c0_23] : memref<72x32xf32, #tpu.memory_space<vmem>>, vector<64x32xf32>
    %17 = arith.truncf %16 : vector<64x32xf32> to vector<64x32xbf16>
    %c0_24 = arith.constant 0 : index
    %c0_25 = arith.constant 0 : index
    %c0_26 = arith.constant 0 : index
    %18 = vector.load %arg2[%c0_24, %c0_25, %c0_26] : memref<5x32x168xbf16, #tpu.memory_space<vmem>>, vector<1x32x168xbf16>
    %19 = vector.shape_cast %18 : vector<1x32x168xbf16> to vector<32x168xbf16>
    %cst_27 = arith.constant dense<0.000000e+00> : vector<64x168xf32>
    %20 = tpu.matmul %17, %19, %cst_27 {dimension_numbers = #tpu.dot_dimension_numbers<[1], [0], [0], [1], [0, 0, 1, 1], [], []>} : vector<64x32xbf16>, vector<32x168xbf16>, vector<64x168xf32> -> vector<64x168xf32>
    %c1_28 = arith.constant 1 : index
    %c0_29 = arith.constant 0 : index
    %21 = vector.load %arg15[%c1_28, %c0_29] : memref<72x32xf32, #tpu.memory_space<vmem>>, vector<64x32xf32>
    %22 = arith.truncf %21 : vector<64x32xf32> to vector<64x32xbf16>
    %c1_30 = arith.constant 1 : index
    %c0_31 = arith.constant 0 : index
    %c0_32 = arith.constant 0 : index
    %23 = vector.load %arg2[%c1_30, %c0_31, %c0_32] : memref<5x32x168xbf16, #tpu.memory_space<vmem>>, vector<1x32x168xbf16>
    %24 = vector.shape_cast %23 : vector<1x32x168xbf16> to vector<32x168xbf16>
    %cst_33 = arith.constant dense<0.000000e+00> : vector<64x168xf32>
    %25 = tpu.matmul %22, %24, %cst_33 {dimension_numbers = #tpu.dot_dimension_numbers<[1], [0], [0], [1], [0, 0, 1, 1], [], []>} : vector<64x32xbf16>, vector<32x168xbf16>, vector<64x168xf32> -> vector<64x168xf32>
    %26 = arith.addf %20, %25 : vector<64x168xf32>
    %c2 = arith.constant 2 : index
    %c0_34 = arith.constant 0 : index
    %27 = vector.load %arg15[%c2, %c0_34] : memref<72x32xf32, #tpu.memory_space<vmem>>, vector<64x32xf32>
    %28 = arith.truncf %27 : vector<64x32xf32> to vector<64x32xbf16>
    %c2_35 = arith.constant 2 : index
    %c0_36 = arith.constant 0 : index
    %c0_37 = arith.constant 0 : index
    %29 = vector.load %arg2[%c2_35, %c0_36, %c0_37] : memref<5x32x168xbf16, #tpu.memory_space<vmem>>, vector<1x32x168xbf16>
    %30 = vector.shape_cast %29 : vector<1x32x168xbf16> to vector<32x168xbf16>
    %cst_38 = arith.constant dense<0.000000e+00> : vector<64x168xf32>
    %31 = tpu.matmul %28, %30, %cst_38 {dimension_numbers = #tpu.dot_dimension_numbers<[1], [0], [0], [1], [0, 0, 1, 1], [], []>} : vector<64x32xbf16>, vector<32x168xbf16>, vector<64x168xf32> -> vector<64x168xf32>
    %32 = arith.addf %26, %31 : vector<64x168xf32>
    %c3 = arith.constant 3 : index
    %c0_39 = arith.constant 0 : index
    %33 = vector.load %arg15[%c3, %c0_39] : memref<72x32xf32, #tpu.memory_space<vmem>>, vector<64x32xf32>
    %34 = arith.truncf %33 : vector<64x32xf32> to vector<64x32xbf16>
    %c3_40 = arith.constant 3 : index
    %c0_41 = arith.constant 0 : index
    %c0_42 = arith.constant 0 : index
    %35 = vector.load %arg2[%c3_40, %c0_41, %c0_42] : memref<5x32x168xbf16, #tpu.memory_space<vmem>>, vector<1x32x168xbf16>
    %36 = vector.shape_cast %35 : vector<1x32x168xbf16> to vector<32x168xbf16>
    %cst_43 = arith.constant dense<0.000000e+00> : vector<64x168xf32>
    %37 = tpu.matmul %34, %36, %cst_43 {dimension_numbers = #tpu.dot_dimension_numbers<[1], [0], [0], [1], [0, 0, 1, 1], [], []>} : vector<64x32xbf16>, vector<32x168xbf16>, vector<64x168xf32> -> vector<64x168xf32>
    %38 = arith.addf %32, %37 : vector<64x168xf32>
    %c4 = arith.constant 4 : index
    %c0_44 = arith.constant 0 : index
    %39 = vector.load %arg15[%c4, %c0_44] : memref<72x32xf32, #tpu.memory_space<vmem>>, vector<64x32xf32>
    %40 = arith.truncf %39 : vector<64x32xf32> to vector<64x32xbf16>
    %c4_45 = arith.constant 4 : index
    %c0_46 = arith.constant 0 : index
    %c0_47 = arith.constant 0 : index
    %41 = vector.load %arg2[%c4_45, %c0_46, %c0_47] : memref<5x32x168xbf16, #tpu.memory_space<vmem>>, vector<1x32x168xbf16>
    %42 = vector.shape_cast %41 : vector<1x32x168xbf16> to vector<32x168xbf16>
    %cst_48 = arith.constant dense<0.000000e+00> : vector<64x168xf32>
    %43 = tpu.matmul %40, %42, %cst_48 {dimension_numbers = #tpu.dot_dimension_numbers<[1], [0], [0], [1], [0, 0, 1, 1], [], []>} : vector<64x32xbf16>, vector<32x168xbf16>, vector<64x168xf32> -> vector<64x168xf32>
    %44 = arith.addf %38, %43 : vector<64x168xf32>
    %45 = arith.truncf %44 : vector<64x168xf32> to vector<64x168xbf16>
    %cst_49 = arith.constant dense<0.000000e+00> : vector<64x84xf32>
    %46 = tpu.matmul %45, %9, %cst_49 {dimension_numbers = #tpu.dot_dimension_numbers<[1], [0], [0], [1], [0, 0, 1, 1], [], []>} : vector<64x168xbf16>, vector<168x84xbf16>, vector<64x84xf32> -> vector<64x84xf32>
    %cst_50 = arith.constant dense<0.000000e+00> : vector<64x84xf32>
    %47 = tpu.matmul %45, %11, %cst_50 {dimension_numbers = #tpu.dot_dimension_numbers<[1], [0], [0], [1], [0, 0, 1, 1], [], []>} : vector<64x168xbf16>, vector<168x84xbf16>, vector<64x84xf32> -> vector<64x84xf32>
    %48 = arith.maximumf %46, %47 : vector<64x84xf32>
    %49 = vector.broadcast %6 : vector<1x84xf32> to vector<64x84xf32>
    %50 = arith.addf %48, %49 : vector<64x84xf32>
    %cst_51 = arith.constant 0.000000e+00 : f32
    %51 = vector.broadcast %cst_51 : f32 to vector<64x84xf32>
    %52 = arith.maximumf %50, %51 : vector<64x84xf32>
    %c0_52 = arith.constant 0 : index
    %c0_53 = arith.constant 0 : index
    %53 = vector.load %arg16[%c0_52, %c0_53] : memref<72x84xf32, #tpu.memory_space<vmem>>, vector<64x84xf32>
    tpu.vector_store %arg16[%c0_52, %c0_53], %52 {strides = array<i32>} : memref<72x84xf32, #tpu.memory_space<vmem>>, vector<64x84xf32>,
    %c0_54 = arith.constant 0 : index
    %c0_55 = arith.constant 0 : index
    %54 = tpu.strided_load %arg16[%c0_54, %c0_55] {strides = array<i32: 2, 1>} : memref<72x84xf32, #tpu.memory_space<vmem>>, vector<32x84xf32>
    %c1_56 = arith.constant 1 : index
    %c0_57 = arith.constant 0 : index
    %55 = tpu.strided_load %arg16[%c1_56, %c0_57] {strides = array<i32: 2, 1>} : memref<72x84xf32, #tpu.memory_space<vmem>>, vector<32x84xf32>
    %56 = arith.maximumf %54, %55 : vector<32x84xf32>
    %57 = arith.truncf %56 : vector<32x84xf32> to vector<32x84xbf16>
    %c0_58 = arith.constant 0 : index
    %c0_59 = arith.constant 0 : index
    %c0_60 = arith.constant 0 : index
    %58 = vector.load %arg5[%c0_58, %c0_59, %c0_60] : memref<5x84x160xbf16, #tpu.memory_space<vmem>>, vector<1x84x160xbf16>
    %59 = vector.shape_cast %58 : vector<1x84x160xbf16> to vector<84x160xbf16>
    %cst_61 = arith.constant dense<0.000000e+00> : vector<32x160xf32>
    %60 = tpu.matmul %57, %59, %cst_61 {dimension_numbers = #tpu.dot_dimension_numbers<[1], [0], [0], [1], [0, 0, 1, 1], [], []>} : vector<32x84xbf16>, vector<84x160xbf16>, vector<32x160xf32> -> vector<32x160xf32>
    %c2_62 = arith.constant 2 : index
    %c0_63 = arith.constant 0 : index
    %61 = tpu.strided_load %arg16[%c2_62, %c0_63] {strides = array<i32: 2, 1>} : memref<72x84xf32, #tpu.memory_space<vmem>>, vector<32x84xf32>
    %c3_64 = arith.constant 3 : index
    %c0_65 = arith.constant 0 : index
    %62 = tpu.strided_load %arg16[%c3_64, %c0_65] {strides = array<i32: 2, 1>} : memref<72x84xf32, #tpu.memory_space<vmem>>, vector<32x84xf32>
    %63 = arith.maximumf %61, %62 : vector<32x84xf32>
    %64 = arith.truncf %63 : vector<32x84xf32> to vector<32x84xbf16>
    %c1_66 = arith.constant 1 : index
    %c0_67 = arith.constant 0 : index
    %c0_68 = arith.constant 0 : index
    %65 = vector.load %arg5[%c1_66, %c0_67, %c0_68] : memref<5x84x160xbf16, #tpu.memory_space<vmem>>, vector<1x84x160xbf16>
    %66 = vector.shape_cast %65 : vector<1x84x160xbf16> to vector<84x160xbf16>
    %cst_69 = arith.constant dense<0.000000e+00> : vector<32x160xf32>
    %67 = tpu.matmul %64, %66, %cst_69 {dimension_numbers = #tpu.dot_dimension_numbers<[1], [0], [0], [1], [0, 0, 1, 1], [], []>} : vector<32x84xbf16>, vector<84x160xbf16>, vector<32x160xf32> -> vector<32x160xf32>
    %68 = arith.addf %60, %67 : vector<32x160xf32>
    %c4_70 = arith.constant 4 : index
    %c0_71 = arith.constant 0 : index
    %69 = tpu.strided_load %arg16[%c4_70, %c0_71] {strides = array<i32: 2, 1>} : memref<72x84xf32, #tpu.memory_space<vmem>>, vector<32x84xf32>
    %c5 = arith.constant 5 : index
    %c0_72 = arith.constant 0 : index
    %70 = tpu.strided_load %arg16[%c5, %c0_72] {strides = array<i32: 2, 1>} : memref<72x84xf32, #tpu.memory_space<vmem>>, vector<32x84xf32>
    %71 = arith.maximumf %69, %70 : vector<32x84xf32>
    %72 = arith.truncf %71 : vector<32x84xf32> to vector<32x84xbf16>
    %c2_73 = arith.constant 2 : index
    %c0_74 = arith.constant 0 : index
    %c0_75 = arith.constant 0 : index
    %73 = vector.load %arg5[%c2_73, %c0_74, %c0_75] : memref<5x84x160xbf16, #tpu.memory_space<vmem>>, vector<1x84x160xbf16>
    %74 = vector.shape_cast %73 : vector<1x84x160xbf16> to vector<84x160xbf16>
    %cst_76 = arith.constant dense<0.000000e+00> : vector<32x160xf32>
    %75 = tpu.matmul %72, %74, %cst_76 {dimension_numbers = #tpu.dot_dimension_numbers<[1], [0], [0], [1], [0, 0, 1, 1], [], []>} : vector<32x84xbf16>, vector<84x160xbf16>, vector<32x160xf32> -> vector<32x160xf32>
    %76 = arith.addf %68, %75 : vector<32x160xf32>
    %c6 = arith.constant 6 : index
    %c0_77 = arith.constant 0 : index
    %77 = tpu.strided_load %arg16[%c6, %c0_77] {strides = array<i32: 2, 1>} : memref<72x84xf32, #tpu.memory_space<vmem>>, vector<32x84xf32>
    %c7 = arith.constant 7 : index
    %c0_78 = arith.constant 0 : index
    %78 = tpu.strided_load %arg16[%c7, %c0_78] {strides = array<i32: 2, 1>} : memref<72x84xf32, #tpu.memory_space<vmem>>, vector<32x84xf32>
    %79 = arith.maximumf %77, %78 : vector<32x84xf32>
    %80 = arith.truncf %79 : vector<32x84xf32> to vector<32x84xbf16>
    %c3_79 = arith.constant 3 : index
    %c0_80 = arith.constant 0 : index
    %c0_81 = arith.constant 0 : index
    %81 = vector.load %arg5[%c3_79, %c0_80, %c0_81] : memref<5x84x160xbf16, #tpu.memory_space<vmem>>, vector<1x84x160xbf16>
    %82 = vector.shape_cast %81 : vector<1x84x160xbf16> to vector<84x160xbf16>
    %cst_82 = arith.constant dense<0.000000e+00> : vector<32x160xf32>
    %83 = tpu.matmul %80, %82, %cst_82 {dimension_numbers = #tpu.dot_dimension_numbers<[1], [0], [0], [1], [0, 0, 1, 1], [], []>} : vector<32x84xbf16>, vector<84x160xbf16>, vector<32x160xf32> -> vector<32x160xf32>
    %84 = arith.addf %76, %83 : vector<32x160xf32>
    %c8 = arith.constant 8 : index
    %c0_83 = arith.constant 0 : index
    %85 = tpu.strided_load %arg16[%c8, %c0_83] {strides = array<i32: 2, 1>} : memref<72x84xf32, #tpu.memory_space<vmem>>, vector<32x84xf32>
    %c9 = arith.constant 9 : index
    %c0_84 = arith.constant 0 : index
    %86 = tpu.strided_load %arg16[%c9, %c0_84] {strides = array<i32: 2, 1>} : memref<72x84xf32, #tpu.memory_space<vmem>>, vector<32x84xf32>
    %87 = arith.maximumf %85, %86 : vector<32x84xf32>
    %88 = arith.truncf %87 : vector<32x84xf32> to vector<32x84xbf16>
    %c4_85 = arith.constant 4 : index
    %c0_86 = arith.constant 0 : index
    %c0_87 = arith.constant 0 : index
    %89 = vector.load %arg5[%c4_85, %c0_86, %c0_87] : memref<5x84x160xbf16, #tpu.memory_space<vmem>>, vector<1x84x160xbf16>
    %90 = vector.shape_cast %89 : vector<1x84x160xbf16> to vector<84x160xbf16>
    %cst_88 = arith.constant dense<0.000000e+00> : vector<32x160xf32>
    %91 = tpu.matmul %88, %90, %cst_88 {dimension_numbers = #tpu.dot_dimension_numbers<[1], [0], [0], [1], [0, 0, 1, 1], [], []>} : vector<32x84xbf16>, vector<84x160xbf16>, vector<32x160xf32> -> vector<32x160xf32>
    %92 = arith.addf %84, %91 : vector<32x160xf32>
    %93 = arith.truncf %92 : vector<32x160xf32> to vector<32x160xbf16>
    %cst_89 = arith.constant dense<0.000000e+00> : vector<32x80xf32>
    %94 = tpu.matmul %93, %13, %cst_89 {dimension_numbers = #tpu.dot_dimension_numbers<[1], [0], [0], [1], [0, 0, 1, 1], [], []>} : vector<32x160xbf16>, vector<160x80xbf16>, vector<32x80xf32> -> vector<32x80xf32>
    %cst_90 = arith.constant dense<0.000000e+00> : vector<32x80xf32>
    %95 = tpu.matmul %93, %15, %cst_90 {dimension_numbers = #tpu.dot_dimension_numbers<[1], [0], [0], [1], [0, 0, 1, 1], [], []>} : vector<32x160xbf16>, vector<160x80xbf16>, vector<32x80xf32> -> vector<32x80xf32>
    %96 = arith.maximumf %94, %95 : vector<32x80xf32>
    %97 = vector.broadcast %7 : vector<1x80xf32> to vector<32x80xf32>
    %98 = arith.addf %96, %97 : vector<32x80xf32>
    %cst_91 = arith.constant 0.000000e+00 : f32
    %99 = vector.broadcast %cst_91 : f32 to vector<32x80xf32>
    %100 = arith.maximumf %98, %99 : vector<32x80xf32>
    %c0_92 = arith.constant 0 : index
    %c0_93 = arith.constant 0 : index
    %101 = vector.load %arg17[%c0_92, %c0_93] : memref<32x80xf32, #tpu.memory_space<vmem>>, vector<32x80xf32>
    tpu.vector_store %arg17[%c0_92, %c0_93], %100 {strides = array<i32>} : memref<32x80xf32, #tpu.memory_space<vmem>>, vector<32x80xf32>,
    %c0_94 = arith.constant 0 : index
    %c0_95 = arith.constant 0 : index
    %102 = tpu.strided_load %arg17[%c0_94, %c0_95] {strides = array<i32: 16, 1>} : memref<32x80xf32, #tpu.memory_space<vmem>>, vector<2x80xf32>
    %c1_96 = arith.constant 1 : index
    %c0_97 = arith.constant 0 : index
    %103 = tpu.strided_load %arg17[%c1_96, %c0_97] {strides = array<i32: 16, 1>} : memref<32x80xf32, #tpu.memory_space<vmem>>, vector<2x80xf32>
    %104 = arith.maximumf %102, %103 : vector<2x80xf32>
    %105 = arith.truncf %104 : vector<2x80xf32> to vector<2x80xbf16>
    %c0_98 = arith.constant 0 : index
    %c0_99 = arith.constant 0 : index
    %c0_100 = arith.constant 0 : index
    %106 = vector.load %arg8[%c0_98, %c0_99, %c0_100] : memref<5x80x128xbf16, #tpu.memory_space<vmem>>, vector<1x80x128xbf16>
    %107 = vector.shape_cast %106 : vector<1x80x128xbf16> to vector<80x128xbf16>
    %cst_101 = arith.constant dense<0.000000e+00> : vector<2x128xf32>
    %108 = tpu.matmul %105, %107, %cst_101 {dimension_numbers = #tpu.dot_dimension_numbers<[1], [0], [0], [1], [0, 0, 1, 1], [], []>} : vector<2x80xbf16>, vector<80x128xbf16>, vector<2x128xf32> -> vector<2x128xf32>
    %c2_102 = arith.constant 2 : index
    %c0_103 = arith.constant 0 : index
    %109 = tpu.strided_load %arg17[%c2_102, %c0_103] {strides = array<i32: 16, 1>} : memref<32x80xf32, #tpu.memory_space<vmem>>, vector<2x80xf32>
    %c3_104 = arith.constant 3 : index
    %c0_105 = arith.constant 0 : index
    %110 = tpu.strided_load %arg17[%c3_104, %c0_105] {strides = array<i32: 16, 1>} : memref<32x80xf32, #tpu.memory_space<vmem>>, vector<2x80xf32>
    %111 = arith.maximumf %109, %110 : vector<2x80xf32>
    %112 = arith.truncf %111 : vector<2x80xf32> to vector<2x80xbf16>
    %c1_106 = arith.constant 1 : index
    %c0_107 = arith.constant 0 : index
    %c0_108 = arith.constant 0 : index
    %113 = vector.load %arg8[%c1_106, %c0_107, %c0_108] : memref<5x80x128xbf16, #tpu.memory_space<vmem>>, vector<1x80x128xbf16>
    %114 = vector.shape_cast %113 : vector<1x80x128xbf16> to vector<80x128xbf16>
    %cst_109 = arith.constant dense<0.000000e+00> : vector<2x128xf32>
    %115 = tpu.matmul %112, %114, %cst_109 {dimension_numbers = #tpu.dot_dimension_numbers<[1], [0], [0], [1], [0, 0, 1, 1], [], []>} : vector<2x80xbf16>, vector<80x128xbf16>, vector<2x128xf32> -> vector<2x128xf32>
    %116 = arith.addf %108, %115 : vector<2x128xf32>
    %c4_110 = arith.constant 4 : index
    %c0_111 = arith.constant 0 : index
    %117 = tpu.strided_load %arg17[%c4_110, %c0_111] {strides = array<i32: 16, 1>} : memref<32x80xf32, #tpu.memory_space<vmem>>, vector<2x80xf32>
    %c5_112 = arith.constant 5 : index
    %c0_113 = arith.constant 0 : index
    %118 = tpu.strided_load %arg17[%c5_112, %c0_113] {strides = array<i32: 16, 1>} : memref<32x80xf32, #tpu.memory_space<vmem>>, vector<2x80xf32>
    %119 = arith.maximumf %117, %118 : vector<2x80xf32>
    %120 = arith.truncf %119 : vector<2x80xf32> to vector<2x80xbf16>
    %c2_114 = arith.constant 2 : index
    %c0_115 = arith.constant 0 : index
    %c0_116 = arith.constant 0 : index
    %121 = vector.load %arg8[%c2_114, %c0_115, %c0_116] : memref<5x80x128xbf16, #tpu.memory_space<vmem>>, vector<1x80x128xbf16>
    %122 = vector.shape_cast %121 : vector<1x80x128xbf16> to vector<80x128xbf16>
    %cst_117 = arith.constant dense<0.000000e+00> : vector<2x128xf32>
    %123 = tpu.matmul %120, %122, %cst_117 {dimension_numbers = #tpu.dot_dimension_numbers<[1], [0], [0], [1], [0, 0, 1, 1], [], []>} : vector<2x80xbf16>, vector<80x128xbf16>, vector<2x128xf32> -> vector<2x128xf32>
    %124 = arith.addf %116, %123 : vector<2x128xf32>
    %c6_118 = arith.constant 6 : index
    %c0_119 = arith.constant 0 : index
    %125 = tpu.strided_load %arg17[%c6_118, %c0_119] {strides = array<i32: 16, 1>} : memref<32x80xf32, #tpu.memory_space<vmem>>, vector<2x80xf32>
    %c7_120 = arith.constant 7 : index
    %c0_121 = arith.constant 0 : index
    %126 = tpu.strided_load %arg17[%c7_120, %c0_121] {strides = array<i32: 16, 1>} : memref<32x80xf32, #tpu.memory_space<vmem>>, vector<2x80xf32>
    %127 = arith.maximumf %125, %126 : vector<2x80xf32>
    %128 = arith.truncf %127 : vector<2x80xf32> to vector<2x80xbf16>
    %c3_122 = arith.constant 3 : index
    %c0_123 = arith.constant 0 : index
    %c0_124 = arith.constant 0 : index
    %129 = vector.load %arg8[%c3_122, %c0_123, %c0_124] : memref<5x80x128xbf16, #tpu.memory_space<vmem>>, vector<1x80x128xbf16>
    %130 = vector.shape_cast %129 : vector<1x80x128xbf16> to vector<80x128xbf16>
    %cst_125 = arith.constant dense<0.000000e+00> : vector<2x128xf32>
    %131 = tpu.matmul %128, %130, %cst_125 {dimension_numbers = #tpu.dot_dimension_numbers<[1], [0], [0], [1], [0, 0, 1, 1], [], []>} : vector<2x80xbf16>, vector<80x128xbf16>, vector<2x128xf32> -> vector<2x128xf32>
    %132 = arith.addf %124, %131 : vector<2x128xf32>
    %c8_126 = arith.constant 8 : index
    %c0_127 = arith.constant 0 : index
    %133 = tpu.strided_load %arg17[%c8_126, %c0_127] {strides = array<i32: 16, 1>} : memref<32x80xf32, #tpu.memory_space<vmem>>, vector<2x80xf32>
    %c9_128 = arith.constant 9 : index
    %c0_129 = arith.constant 0 : index
    %134 = tpu.strided_load %arg17[%c9_128, %c0_129] {strides = array<i32: 16, 1>} : memref<32x80xf32, #tpu.memory_space<vmem>>, vector<2x80xf32>
    %135 = arith.maximumf %133, %134 : vector<2x80xf32>
    %136 = arith.truncf %135 : vector<2x80xf32> to vector<2x80xbf16>
    %c4_130 = arith.constant 4 : index
    %c0_131 = arith.constant 0 : index
    %c0_132 = arith.constant 0 : index
    %137 = vector.load %arg8[%c4_130, %c0_131, %c0_132] : memref<5x80x128xbf16, #tpu.memory_space<vmem>>, vector<1x80x128xbf16>
    %138 = vector.shape_cast %137 : vector<1x80x128xbf16> to vector<80x128xbf16>
    %cst_133 = arith.constant dense<0.000000e+00> : vector<2x128xf32>
    %139 = tpu.matmul %136, %138, %cst_133 {dimension_numbers = #tpu.dot_dimension_numbers<[1], [0], [0], [1], [0, 0, 1, 1], [], []>} : vector<2x80xbf16>, vector<80x128xbf16>, vector<2x128xf32> -> vector<2x128xf32>
    %140 = arith.addf %132, %139 : vector<2x128xf32>
    %c0_134 = arith.constant 0 : index
    %c0_135 = arith.constant 0 : index
    %141 = vector.load %arg9[%c0_134, %c0_135] : memref<1x128xf32, #tpu.memory_space<vmem>>, vector<1x128xf32>
    %142 = vector.broadcast %141 : vector<1x128xf32> to vector<2x128xf32>
    %143 = arith.addf %140, %142 : vector<2x128xf32>
    %cst_136 = arith.constant 0.000000e+00 : f32
    %144 = vector.broadcast %cst_136 : f32 to vector<2x128xf32>
    %145 = arith.maximumf %143, %144 : vector<2x128xf32>
    %146 = arith.truncf %145 : vector<2x128xf32> to vector<2x128xbf16>
    %c0_137 = arith.constant 0 : index
    %c0_138 = arith.constant 0 : index
    %147 = vector.load %arg10[%c0_137, %c0_138] : memref<128x128xbf16, #tpu.memory_space<vmem>>, vector<128x128xbf16>
    %cst_139 = arith.constant dense<0.000000e+00> : vector<2x128xf32>
    %148 = tpu.matmul %146, %147, %cst_139 {dimension_numbers = #tpu.dot_dimension_numbers<[1], [0], [0], [1], [0, 0, 1, 1], [], []>} : vector<2x128xbf16>, vector<128x128xbf16>, vector<2x128xf32> -> vector<2x128xf32>
    %c0_140 = arith.constant 0 : index
    %c0_141 = arith.constant 0 : index
    %149 = vector.load %arg11[%c0_140, %c0_141] : memref<1x128xf32, #tpu.memory_space<vmem>>, vector<1x128xf32>
    %150 = vector.broadcast %149 : vector<1x128xf32> to vector<2x128xf32>
    %151 = arith.addf %148, %150 : vector<2x128xf32>
    %cst_142 = arith.constant 0.000000e+00 : f32
    %152 = vector.broadcast %cst_142 : f32 to vector<2x128xf32>
    %153 = arith.maximumf %151, %152 : vector<2x128xf32>
    %154 = arith.truncf %153 : vector<2x128xf32> to vector<2x128xbf16>
    %c0_143 = arith.constant 0 : index
    %c0_144 = arith.constant 0 : index
    %155 = vector.load %arg12[%c0_143, %c0_144] : memref<128x128xbf16, #tpu.memory_space<vmem>>, vector<128x128xbf16>
    %cst_145 = arith.constant dense<0.000000e+00> : vector<2x128xf32>
    %156 = tpu.matmul %154, %155, %cst_145 {dimension_numbers = #tpu.dot_dimension_numbers<[1], [0], [0], [1], [0, 0, 1, 1], [], []>} : vector<2x128xbf16>, vector<128x128xbf16>, vector<2x128xf32> -> vector<2x128xf32>
    %c0_146 = arith.constant 0 : index
    %c0_147 = arith.constant 0 : index
    %157 = vector.load %arg13[%c0_146, %c0_147] : memref<1x128xf32, #tpu.memory_space<vmem>>, vector<1x128xf32>
    %158 = vector.broadcast %157 : vector<1x128xf32> to vector<2x128xf32>
    %159 = arith.addf %156, %158 : vector<2x128xf32>
    %c0_148 = arith.constant 0 : index
    %c0_149 = arith.constant 0 : index
    %160 = vector.load %arg14[%c0_148, %c0_149] : memref<2x128xf32, #tpu.memory_space<vmem>>, vector<2x128xf32>
    tpu.vector_store %arg14[%c0_148, %c0_149], %159 {strides = array<i32>} : memref<2x128xf32, #tpu.memory_space<vmem>>, vector<2x128xf32>,
    return
  }
  func.func @transform_0(%arg0: i32) -> (i32, i32) {
    %c0_i32 = arith.constant 0 : i32
    %c0_i32_0 = arith.constant 0 : i32
    return %arg0, %c0_i32 : i32, i32
  }
  func.func @transform_1(%arg0: i32) -> (i32, i32, i32) {
    %c0_i32 = arith.constant 0 : i32
    %c0_i32_0 = arith.constant 0 : i32
    %c0_i32_1 = arith.constant 0 : i32
    %c0_i32_2 = arith.constant 0 : i32
    return %c0_i32, %c0_i32_0, %c0_i32_1 : i32, i32, i32
  }
  func.func @transform_2(%arg0: i32) -> (i32, i32) {
    %c0_i32 = arith.constant 0 : i32
    %c0_i32_0 = arith.constant 0 : i32
    %c0_i32_1 = arith.constant 0 : i32
    return %c0_i32, %c0_i32_0 : i32, i32
  }
  func.func @transform_3(%arg0: i32) -> (i32, i32, i32) {
    %c0_i32 = arith.constant 0 : i32
    %c0_i32_0 = arith.constant 0 : i32
    %c0_i32_1 = arith.constant 0 : i32
    %c0_i32_2 = arith.constant 0 : i32
    return %c0_i32, %c0_i32_0, %c0_i32_1 : i32, i32, i32
  }
  func.func @transform_4(%arg0: i32) -> (i32, i32, i32) {
    %c0_i32 = arith.constant 0 : i32
    %c0_i32_0 = arith.constant 0 : i32
    %c0_i32_1 = arith.constant 0 : i32
    %c0_i32_2 = arith.constant 0 : i32
    return %c0_i32, %c0_i32_0, %c0_i32_1 : i32, i32, i32
  }
  func.func @transform_5(%arg0: i32) -> (i32, i32) {
    %c0_i32 = arith.constant 0 : i32
    %c0_i32_0 = arith.constant 0 : i32
    %c0_i32_1 = arith.constant 0 : i32
    return %c0_i32, %c0_i32_0 : i32, i32
  }
  func.func @transform_6(%arg0: i32) -> (i32, i32, i32) {
    %c0_i32 = arith.constant 0 : i32
    %c0_i32_0 = arith.constant 0 : i32
    %c0_i32_1 = arith.constant 0 : i32
    %c0_i32_2 = arith.constant 0 : i32
    return %c0_i32, %c0_i32_0, %c0_i32_1 : i32, i32, i32
  }
  func.func @transform_7(%arg0: i32) -> (i32, i32, i32) {
    %c0_i32 = arith.constant 0 : i32
    %c0_i32_0 = arith.constant 0 : i32
    %c0_i32_1 = arith.constant 0 : i32
    %c0_i32_2 = arith.constant 0 : i32
    return %c0_i32, %c0_i32_0, %c0_i32_1 : i32, i32, i32
  }
  func.func @transform_8(%arg0: i32) -> (i32, i32) {
    %c0_i32 = arith.constant 0 : i32
    %c0_i32_0 = arith.constant 0 : i32
    %c0_i32_1 = arith.constant 0 : i32
    return %c0_i32, %c0_i32_0 : i32, i32
  }
  func.func @transform_9(%arg0: i32) -> (i32, i32) {
    %c0_i32 = arith.constant 0 : i32
    %c0_i32_0 = arith.constant 0 : i32
    %c0_i32_1 = arith.constant 0 : i32
    return %c0_i32, %c0_i32_0 : i32, i32
  }
  func.func @transform_10(%arg0: i32) -> (i32, i32) {
    %c0_i32 = arith.constant 0 : i32
    %c0_i32_0 = arith.constant 0 : i32
    %c0_i32_1 = arith.constant 0 : i32
    return %c0_i32, %c0_i32_0 : i32, i32
  }
  func.func @transform_11(%arg0: i32) -> (i32, i32) {
    %c0_i32 = arith.constant 0 : i32
    %c0_i32_0 = arith.constant 0 : i32
    %c0_i32_1 = arith.constant 0 : i32
    return %c0_i32, %c0_i32_0 : i32, i32
  }
  func.func @transform_12(%arg0: i32) -> (i32, i32) {
    %c0_i32 = arith.constant 0 : i32
    %c0_i32_0 = arith.constant 0 : i32
    %c0_i32_1 = arith.constant 0 : i32
    return %c0_i32, %c0_i32_0 : i32, i32
  }
  func.func @transform_13(%arg0: i32) -> (i32, i32) {
    %c0_i32 = arith.constant 0 : i32
    %c0_i32_0 = arith.constant 0 : i32
    return %arg0, %c0_i32 : i32, i32
  }
}

</mosaic_0001>

<llo_original>
// kernel: lenet5_forward.1
$region0: #{lenet5_forward.1}
  #allocation0 [shape = 'u32[]', space=smem, size = 0x4, offset = 0x4, fixed_abs, tag = 'smem constant byte address 0x4 - core index']
  #allocation1 [shape = 'u32[72,128]{1,0:T(1,128)}', space=vmem, size = 0x9000, scoped, tag = 'internal scratch']
  #allocation2 [shape = 'f32[72,32]{1,0:T(8,128)}', space=vmem, size = 0x9000, scoped, tag = 'scratch operand']
  #allocation3 [shape = 'f32[72,84]{1,0:T(8,128)}', space=vmem, size = 0x9000, scoped, tag = 'scratch operand']
  #allocation4 [shape = 'f32[32,80]{1,0:T(8,128)}', space=vmem, size = 0x4000, scoped, tag = 'scratch operand']
  %s0 = inlined_call_operand.vmem [shape: f32[64,32], index: 0, kind: input, shape index: {}]
  %s1 = inlined_call_operand.vmem [shape: bf16[5,32,168], index: 1, kind: input, shape index: {}]
  %s2 = inlined_call_operand.vmem [shape: f32[1,84], index: 2, kind: input, shape index: {}]
  %s3 = inlined_call_operand.vmem [shape: bf16[2,168,84], index: 3, kind: input, shape index: {}]
  %s4 = inlined_call_operand.vmem [shape: bf16[5,84,160], index: 4, kind: input, shape index: {}]
  %s5 = inlined_call_operand.vmem [shape: f32[1,80], index: 5, kind: input, shape index: {}]
  %s6 = inlined_call_operand.vmem [shape: bf16[2,160,80], index: 6, kind: input, shape index: {}]
  %s7 = inlined_call_operand.vmem [shape: bf16[5,80,128], index: 7, kind: input, shape index: {}]
  %s8 = inlined_call_operand.vmem [shape: f32[1,128], index: 8, kind: input, shape index: {}]
  %s9 = inlined_call_operand.vmem [shape: bf16[128,128], index: 9, kind: input, shape index: {}]
  %s10 = inlined_call_operand.vmem [shape: f32[1,128], index: 10, kind: input, shape index: {}]
  %s11 = inlined_call_operand.vmem [shape: bf16[128,128], index: 11, kind: input, shape index: {}]
  %s12 = inlined_call_operand.vmem [shape: f32[1,128], index: 12, kind: input, shape index: {}]
  %s13 = inlined_call_operand.hbm [shape: f32[2,128], index: 13, kind: output, shape index: {}]
  %s14 = sld [smem:[#allocation0]]
  $region62: #{lenet5_forward.1} parent=0
    _
  %s16 = ssub.s32 1, %s14
  %s17 = scalar_select 0, %s16, %s14
  $region1: #{lenet5_forward.1} parent=0
    #allocation5 [shape = 'u8[1024]{0}', space=vmem, size = 0x400, scoped, tag = 'output window, operand 0, single buffered']
    #allocation6 [shape = 's32[1]{0}', space=sflag, size = 0x4, scoped, tag = 'scoped memory for lenet5_forward.1']
    %18 = vsyncpa [#allocation6], 0
    // Predicated region
    $region2: #{lenet5_forward.1} parent=1 // pred_check
      _
    $region3: #{lenet5_forward.1} parent=1 // pred_check_branch
      %20 = sbr.rel (0) target = $region5
    $region4: #{lenet5_forward.1} parent=1 // pred_region
      _
    $region5: #{lenet5_forward.1} parent=1 // pred_fallthru
      _
    // Predicated region
    $region6: #{lenet5_forward.1} parent=1 // pred_check
      _
    $region7: #{lenet5_forward.1} parent=1 // pred_check_branch
      %22 = sbr.rel (0) target = $region9
    $region8: #{lenet5_forward.1} parent=1 // pred_region
      _
    $region9: #{lenet5_forward.1} parent=1 // pred_fallthru
      _
    // Predicated region
    $region10: #{lenet5_forward.1} parent=1 // pred_check
      _
    $region11: #{lenet5_forward.1} parent=1 // pred_check_branch
      %24 = sbr.rel (0) target = $region13
    $region12: #{lenet5_forward.1} parent=1 // pred_region
      _
    $region13: #{lenet5_forward.1} parent=1 // pred_fallthru
      _
    // Predicated region
    $region14: #{lenet5_forward.1} parent=1 // pred_check
      _
    $region15: #{lenet5_forward.1} parent=1 // pred_check_branch
      %26 = sbr.rel (0) target = $region17
    $region16: #{lenet5_forward.1} parent=1 // pred_region
      _
    $region17: #{lenet5_forward.1} parent=1 // pred_fallthru
      _
    // Predicated region
    $region18: #{lenet5_forward.1} parent=1 // pred_check
      _
    $region19: #{lenet5_forward.1} parent=1 // pred_check_branch
      %28 = sbr.rel (0) target = $region21
    $region20: #{lenet5_forward.1} parent=1 // pred_region
      _
    $region21: #{lenet5_forward.1} parent=1 // pred_fallthru
      _
    // Predicated region
    $region22: #{lenet5_forward.1} parent=1 // pred_check
      _
    $region23: #{lenet5_forward.1} parent=1 // pred_check_branch
      %30 = sbr.rel (0) target = $region25
    $region24: #{lenet5_forward.1} parent=1 // pred_region
      _
    $region25: #{lenet5_forward.1} parent=1 // pred_fallthru
      _
    // Predicated region
    $region26: #{lenet5_forward.1} parent=1 // pred_check
      _
    $region27: #{lenet5_forward.1} parent=1 // pred_check_branch
      %32 = sbr.rel (0) target = $region29
    $region28: #{lenet5_forward.1} parent=1 // pred_region
      _
    $region29: #{lenet5_forward.1} parent=1 // pred_fallthru
      _
    // Predicated region
    $region30: #{lenet5_forward.1} parent=1 // pred_check
      _
    $region31: #{lenet5_forward.1} parent=1 // pred_check_branch
      %34 = sbr.rel (0) target = $region33
    $region32: #{lenet5_forward.1} parent=1 // pred_region
      _
    $region33: #{lenet5_forward.1} parent=1 // pred_fallthru
      _
    // Predicated region
    $region34: #{lenet5_forward.1} parent=1 // pred_check
      _
    $region35: #{lenet5_forward.1} parent=1 // pred_check_branch
      %36 = sbr.rel (0) target = $region37
    $region36: #{lenet5_forward.1} parent=1 // pred_region
      _
    $region37: #{lenet5_forward.1} parent=1 // pred_fallthru
      _
    // Predicated region
    $region38: #{lenet5_forward.1} parent=1 // pred_check
      _
    $region39: #{lenet5_forward.1} parent=1 // pred_check_branch
      %38 = sbr.rel (0) target = $region41
    $region40: #{lenet5_forward.1} parent=1 // pred_region
      _
    $region41: #{lenet5_forward.1} parent=1 // pred_fallthru
      _
    // Predicated region
    $region42: #{lenet5_forward.1} parent=1 // pred_check
      _
    $region43: #{lenet5_forward.1} parent=1 // pred_check_branch
      %40 = sbr.rel (0) target = $region45
    $region44: #{lenet5_forward.1} parent=1 // pred_region
      _
    $region45: #{lenet5_forward.1} parent=1 // pred_fallthru
      _
    // Predicated region
    $region46: #{lenet5_forward.1} parent=1 // pred_check
      _
    $region47: #{lenet5_forward.1} parent=1 // pred_check_branch
      %42 = sbr.rel (0) target = $region49
    $region48: #{lenet5_forward.1} parent=1 // pred_region
      _
    $region49: #{lenet5_forward.1} parent=1 // pred_fallthru
      _
    // Predicated region
    $region50: #{lenet5_forward.1} parent=1 // pred_check
      _
    $region51: #{lenet5_forward.1} parent=1 // pred_check_branch
      %44 = sbr.rel (0) target = $region53
    $region52: #{lenet5_forward.1} parent=1 // pred_region
      _
    $region53: #{lenet5_forward.1} parent=1 // pred_fallthru
      _
    %v46 = vld [vmem:[%s0] sm:$0xff]
    %v47 = vld [vmem:[%s0 + $0x8] sm:$0xff]
    %v48 = vld [vmem:[%s0 + $0x10] sm:$0xff]
    %v49 = vld [vmem:[%s0 + $0x18] sm:$0xff]
    %v50 = vld [vmem:[%s0 + $0x20] sm:$0xff]
    %v51 = vld [vmem:[%s0 + $0x28] sm:$0xff]
    %v52 = vld [vmem:[%s0 + $0x30] sm:$0xff]
    %v53 = vld [vmem:[%s0 + $0x38] sm:$0xff]
    %vm54 = vcmask 261120
    %55 = vst.msk [vmem:[#allocation2] sm:$0xff] %vm54, %v46
    %56 = vst.msk [vmem:[#allocation2 + $0x8] sm:$0xff] %vm54, %v47
    %57 = vst.msk [vmem:[#allocation2 + $0x10] sm:$0xff] %vm54, %v48
    %58 = vst.msk [vmem:[#allocation2 + $0x18] sm:$0xff] %vm54, %v49
    %59 = vst.msk [vmem:[#allocation2 + $0x20] sm:$0xff] %vm54, %v50
    %60 = vst.msk [vmem:[#allocation2 + $0x28] sm:$0xff] %vm54, %v51
    %61 = vst.msk [vmem:[#allocation2 + $0x30] sm:$0xff] %vm54, %v52
    %62 = vst.msk [vmem:[#allocation2 + $0x38] sm:$0xff] %vm54, %v53
    %63 = vst.msk [vmem:[#allocation2 + $0x40] sm:$0xff] %vm54, 0.0
    %vm64 = vcmask 687104
    %65 = vst.msk [vmem:[#allocation3 + $0x40] sm:$0xff] %vm64, 0.0
    %v66 = vld [vmem:[%s2] sm:$0x1]
    %v67 = vld [vmem:[%s5] sm:$0x1]
    %v68 = vld [vmem:[%s3] sm:$0xf]
    %v69 = vld [vmem:[%s3 + $0x4] sm:$0xf]
    %v70 = vld [vmem:[%s3 + $0x8] sm:$0xf]
    %v71 = vld [vmem:[%s3 + $0xc] sm:$0xf]
    %v72 = vld [vmem:[%s3 + $0x10] sm:$0xf]
    %v73 = vld [vmem:[%s3 + $0x14] sm:$0xf]
    %v74 = vld [vmem:[%s3 + $0x18] sm:$0xf]
    %v75 = vld [vmem:[%s3 + $0x1c] sm:$0xf]
    %v76 = vld [vmem:[%s3 + $0x20] sm:$0xf]
    %v77 = vld [vmem:[%s3 + $0x24] sm:$0xf]
    %v78 = vld [vmem:[%s3 + $0x28] sm:$0xf]
    %v79 = vld [vmem:[%s3 + $0x2c] sm:$0xf]
    %v80 = vld [vmem:[%s3 + $0x30] sm:$0xf]
    %v81 = vld [vmem:[%s3 + $0x34] sm:$0xf]
    %v82 = vld [vmem:[%s3 + $0x38] sm:$0xf]
    %v83 = vld [vmem:[%s3 + $0x3c] sm:$0xf]
    %v84 = vld [vmem:[%s3 + $0x40] sm:$0xf]
    %v85 = vld [vmem:[%s3 + $0x44] sm:$0xf]
    %v86 = vld [vmem:[%s3 + $0x48] sm:$0xf]
    %v87 = vld [vmem:[%s3 + $0x4c] sm:$0xf]
    %v88 = vld [vmem:[%s3 + $0x50] sm:$0xf]
    %s89 = scalar_lea.vmem %s3, 84
    %v90 = vld [vmem:[%s89] sm:$0xf]
    %v91 = vld [vmem:[%s89 + $0x4] sm:$0xf]
    %v92 = vld [vmem:[%s89 + $0x8] sm:$0xf]
    %v93 = vld [vmem:[%s89 + $0xc] sm:$0xf]
    %v94 = vld [vmem:[%s89 + $0x10] sm:$0xf]
    %v95 = vld [vmem:[%s89 + $0x14] sm:$0xf]
    %v96 = vld [vmem:[%s89 + $0x18] sm:$0xf]
    %v97 = vld [vmem:[%s89 + $0x1c] sm:$0xf]
    %v98 = vld [vmem:[%s89 + $0x20] sm:$0xf]
    %v99 = vld [vmem:[%s89 + $0x24] sm:$0xf]
    %v100 = vld [vmem:[%s89 + $0x28] sm:$0xf]
    %v101 = vld [vmem:[%s89 + $0x2c] sm:$0xf]
    %v102 = vld [vmem:[%s89 + $0x30] sm:$0xf]
    %v103 = vld [vmem:[%s89 + $0x34] sm:$0xf]
    %v104 = vld [vmem:[%s89 + $0x38] sm:$0xf]
    %v105 = vld [vmem:[%s89 + $0x3c] sm:$0xf]
    %v106 = vld [vmem:[%s89 + $0x40] sm:$0xf]
    %v107 = vld [vmem:[%s89 + $0x44] sm:$0xf]
    %v108 = vld [vmem:[%s89 + $0x48] sm:$0xf]
    %v109 = vld [vmem:[%s89 + $0x4c] sm:$0xf]
    %v110 = vld [vmem:[%s89 + $0x50] sm:$0xf]
    %v111 = vld [vmem:[%s6] sm:$0xf]
    %v112 = vld [vmem:[%s6 + $0x4] sm:$0xf]
    %v113 = vld [vmem:[%s6 + $0x8] sm:$0xf]
    %v114 = vld [vmem:[%s6 + $0xc] sm:$0xf]
    %v115 = vld [vmem:[%s6 + $0x10] sm:$0xf]
    %v116 = vld [vmem:[%s6 + $0x14] sm:$0xf]
    %v117 = vld [vmem:[%s6 + $0x18] sm:$0xf]
    %v118 = vld [vmem:[%s6 + $0x1c] sm:$0xf]
    %v119 = vld [vmem:[%s6 + $0x20] sm:$0xf]
    %v120 = vld [vmem:[%s6 + $0x24] sm:$0xf]
    %v121 = vld [vmem:[%s6 + $0x28] sm:$0xf]
    %v122 = vld [vmem:[%s6 + $0x2c] sm:$0xf]
    %v123 = vld [vmem:[%s6 + $0x30] sm:$0xf]
    %v124 = vld [vmem:[%s6 + $0x34] sm:$0xf]
    %v125 = vld [vmem:[%s6 + $0x38] sm:$0xf]
    %v126 = vld [vmem:[%s6 + $0x3c] sm:$0xf]
    %v127 = vld [vmem:[%s6 + $0x40] sm:$0xf]
    %v128 = vld [vmem:[%s6 + $0x44] sm:$0xf]
    %v129 = vld [vmem:[%s6 + $0x48] sm:$0xf]
    %v130 = vld [vmem:[%s6 + $0x4c] sm:$0xf]
    %s131 = scalar_lea.vmem %s6, 80
    %v132 = vld [vmem:[%s131] sm:$0xf]
    %v133 = vld [vmem:[%s131 + $0x4] sm:$0xf]
    %v134 = vld [vmem:[%s131 + $0x8] sm:$0xf]
    %v135 = vld [vmem:[%s131 + $0xc] sm:$0xf]
    %v136 = vld [vmem:[%s131 + $0x10] sm:$0xf]
    %v137 = vld [vmem:[%s131 + $0x14] sm:$0xf]
    %v138 = vld [vmem:[%s131 + $0x18] sm:$0xf]
    %v139 = vld [vmem:[%s131 + $0x1c] sm:$0xf]
    %v140 = vld [vmem:[%s131 + $0x20] sm:$0xf]
    %v141 = vld [vmem:[%s131 + $0x24] sm:$0xf]
    %v142 = vld [vmem:[%s131 + $0x28] sm:$0xf]
    %v143 = vld [vmem:[%s131 + $0x2c] sm:$0xf]
    %v144 = vld [vmem:[%s131 + $0x30] sm:$0xf]
    %v145 = vld [vmem:[%s131 + $0x34] sm:$0xf]
    %v146 = vld [vmem:[%s131 + $0x38] sm:$0xf]
    %v147 = vld [vmem:[%s131 + $0x3c] sm:$0xf]
    %v148 = vld [vmem:[%s131 + $0x40] sm:$0xf]
    %v149 = vld [vmem:[%s131 + $0x44] sm:$0xf]
    %v150 = vld [vmem:[%s131 + $0x48] sm:$0xf]
    %v151 = vld [vmem:[%s131 + $0x4c] sm:$0xf]
    %v152 = vld [vmem:[#allocation2] sm:$0xff]
    %v153 = vld [vmem:[#allocation2 + $0x8] sm:$0xff]
    %v154 = vld [vmem:[#allocation2 + $0x10] sm:$0xff]
    %v155 = vld [vmem:[#allocation2 + $0x18] sm:$0xff]
    %v156 = vld [vmem:[#allocation2 + $0x20] sm:$0xff]
    %v157 = vld [vmem:[#allocation2 + $0x28] sm:$0xff]
    %v158 = vld [vmem:[#allocation2 + $0x30] sm:$0xff]
    %v159 = vld [vmem:[#allocation2 + $0x38] sm:$0xff]
    %v160 = vpack.c.bf16 %v153, %v152
    %v161 = vpack.c.bf16 %v155, %v154
    %v162 = vpack.c.bf16 %v157, %v156
    %v163 = vpack.c.bf16 %v159, %v158
    %v164 = vld [vmem:[%s1] sm:$0xff]
    %v165 = vld [vmem:[%s1 + $0x8] sm:$0xff]
    %v166 = vld [vmem:[%s1 + $0x10] sm:$0xff]
    %v167 = vld [vmem:[%s1 + $0x18] sm:$0xff]
    %v168 = vld [vmem:[#allocation2 + $0x1] sm:$0xff]
    %v169 = vld [vmem:[#allocation2 + $0x9] sm:$0xff]
    %v170 = vld [vmem:[#allocation2 + $0x11] sm:$0xff]
    %v171 = vld [vmem:[#allocation2 + $0x19] sm:$0xff]
    %v172 = vld [vmem:[#allocation2 + $0x21] sm:$0xff]
    %v173 = vld [vmem:[#allocation2 + $0x29] sm:$0xff]
    %v174 = vld [vmem:[#allocation2 + $0x31] sm:$0xff]
    %v175 = vld [vmem:[#allocation2 + $0x39] sm:$0xff]
    %v176 = vpack.c.bf16 %v169, %v168
    %v177 = vpack.c.bf16 %v171, %v170
    %v178 = vpack.c.bf16 %v173, %v172
    %v179 = vpack.c.bf16 %v175, %v174
    %s180 = scalar_lea.vmem %s1, 32
    %v181 = vld [vmem:[%s180] sm:$0xff]
    %v182 = vld [vmem:[%s180 + $0x8] sm:$0xff]
    %v183 = vld [vmem:[%s180 + $0x10] sm:$0xff]
    %v184 = vld [vmem:[%s180 + $0x18] sm:$0xff]
    %v189 = vunpack.c.l.b16 %v181
    %v190 = vunpack.c.h.b16 %v181
    %v191 = vunpack.c.l.b16 %v182
    %v192 = vunpack.c.h.b16 %v182
    %v193 = vunpack.c.l.b16 %v183
    %v194 = vunpack.c.h.b16 %v183
    %v195 = vunpack.c.l.b16 %v184
    %v196 = vunpack.c.h.b16 %v184
    %v197 = vpack.c.b16 %v191, %v189
    %v198 = vpack.c.b16 %v192, %v190
    %v199 = vpack.c.b16 %v195, %v193
    %v200 = vpack.c.b16 %v196, %v194
    %v206 = vsel %vm54, %v176, 0
    %v209 = vsel %vm54, %v177, 0
    %v212 = vsel %vm54, %v178, 0
    %v215 = vsel %vm54, %v179, 0
    %217 = vmatpush.bf16.msra.mxu0 0
    %218 = vmatpush.bf16.msra.mxu0 0
    %219 = vmatpush.bf16.msra.mxu0 0
    %220 = vmatpush.bf16.msra.mxu0 0
    %221 = vmatpush.bf16.msra.mxu0 0
    %222 = vmatpush.bf16.msra.mxu0 0
    %223 = vmatpush.bf16.msra.mxu0 %v199
    %224 = vmatpush.bf16.msra.mxu0 %v197
    %225 = vmatmul.bf16.gmra.mxu0 %v206
    %v226 = vpop.f32.mrf.mxu0
    %v227 = vadd.f32 0.0, %v226
    %v228 = vpop.f32.mrf.mxu0
    %v229 = vadd.f32 0.0, %v228
    %230 = vmatmul.bf16.gmra.mxu0 %v209
    %v231 = vpop.f32.mrf.mxu0
    %v232 = vadd.f32 0.0, %v231
    %v233 = vpop.f32.mrf.mxu0
    %v234 = vadd.f32 0.0, %v233
    %235 = vmatmul.bf16.gmra.mxu0 %v212
    %v236 = vpop.f32.mrf.mxu0
    %v237 = vadd.f32 0.0, %v236
    %v238 = vpop.f32.mrf.mxu0
    %v239 = vadd.f32 0.0, %v238
    %240 = vmatmul.bf16.gmra.mxu0 %v215
    %v241 = vpop.f32.mrf.mxu0
    %v242 = vadd.f32 0.0, %v241
    %v243 = vpop.f32.mrf.mxu0
    %v244 = vadd.f32 0.0, %v243
    %245 = vdwg.mxu0
    %246 = vmatpush.bf16.msra.mxu0 0
    %247 = vmatpush.bf16.msra.mxu0 0
    %248 = vmatpush.bf16.msra.mxu0 0
    %249 = vmatpush.bf16.msra.mxu0 0
    %250 = vmatpush.bf16.msra.mxu0 0
    %251 = vmatpush.bf16.msra.mxu0 0
    %252 = vmatpush.bf16.msra.mxu0 %v200
    %253 = vmatpush.bf16.msra.mxu0 %v198
    %254 = vmatmul.bf16.gmra.mxu0 %v206
    %v255 = vpop.f32.mrf.mxu0
    %v256 = vadd.f32 0.0, %v255
    %v257 = vpop.f32.mrf.mxu0
    %v258 = vadd.f32 0.0, %v257
    %259 = vmatmul.bf16.gmra.mxu0 %v209
    %v260 = vpop.f32.mrf.mxu0
    %v261 = vadd.f32 0.0, %v260
    %v262 = vpop.f32.mrf.mxu0
    %v263 = vadd.f32 0.0, %v262
    %264 = vmatmul.bf16.gmra.mxu0 %v212
    %v265 = vpop.f32.mrf.mxu0
    %v266 = vadd.f32 0.0, %v265
    %v267 = vpop.f32.mrf.mxu0
    %v268 = vadd.f32 0.0, %v267
    %269 = vmatmul.bf16.gmra.mxu0 %v215
    %v270 = vpop.f32.mrf.mxu0
    %v271 = vadd.f32 0.0, %v270
    %v272 = vpop.f32.mrf.mxu0
    %v273 = vadd.f32 0.0, %v272
    %274 = vdwg.mxu0
    %v279 = vunpack.c.l.b16 %v164
    %v280 = vunpack.c.h.b16 %v164
    %v281 = vunpack.c.l.b16 %v165
    %v282 = vunpack.c.h.b16 %v165
    %v283 = vunpack.c.l.b16 %v166
    %v284 = vunpack.c.h.b16 %v166
    %v285 = vunpack.c.l.b16 %v167
    %v286 = vunpack.c.h.b16 %v167
    %v287 = vpack.c.b16 %v281, %v279
    %v288 = vpack.c.b16 %v282, %v280
    %v289 = vpack.c.b16 %v285, %v283
    %v290 = vpack.c.b16 %v286, %v284
    %v296 = vsel %vm54, %v160, 0
    %v299 = vsel %vm54, %v161, 0
    %v302 = vsel %vm54, %v162, 0
    %v305 = vsel %vm54, %v163, 0
    %307 = vmatpush.bf16.msra.mxu0 0
    %308 = vmatpush.bf16.msra.mxu0 0
    %309 = vmatpush.bf16.msra.mxu0 0
    %310 = vmatpush.bf16.msra.mxu0 0
    %311 = vmatpush.bf16.msra.mxu0 0
    %312 = vmatpush.bf16.msra.mxu0 0
    %313 = vmatpush.bf16.msra.mxu0 %v289
    %314 = vmatpush.bf16.msra.mxu0 %v287
    %315 = vmatmul.bf16.gmra.mxu0 %v296
    %v316 = vpop.f32.mrf.mxu0
    %v317 = vadd.f32 %v227, %v316
    %v318 = vpop.f32.mrf.mxu0
    %v319 = vadd.f32 %v229, %v318
    %320 = vmatmul.bf16.gmra.mxu0 %v299
    %v321 = vpop.f32.mrf.mxu0
    %v322 = vadd.f32 %v232, %v321
    %v323 = vpop.f32.mrf.mxu0
    %v324 = vadd.f32 %v234, %v323
    %325 = vmatmul.bf16.gmra.mxu0 %v302
    %v326 = vpop.f32.mrf.mxu0
    %v327 = vadd.f32 %v237, %v326
    %v328 = vpop.f32.mrf.mxu0
    %v329 = vadd.f32 %v239, %v328
    %330 = vmatmul.bf16.gmra.mxu0 %v305
    %v331 = vpop.f32.mrf.mxu0
    %v332 = vadd.f32 %v242, %v331
    %v333 = vpop.f32.mrf.mxu0
    %v334 = vadd.f32 %v244, %v333
    %335 = vdwg.mxu0
    %336 = vmatpush.bf16.msra.mxu0 0
    %337 = vmatpush.bf16.msra.mxu0 0
    %338 = vmatpush.bf16.msra.mxu0 0
    %339 = vmatpush.bf16.msra.mxu0 0
    %340 = vmatpush.bf16.msra.mxu0 0
    %341 = vmatpush.bf16.msra.mxu0 0
    %342 = vmatpush.bf16.msra.mxu0 %v290
    %343 = vmatpush.bf16.msra.mxu0 %v288
    %344 = vmatmul.bf16.gmra.mxu0 %v296
    %v345 = vpop.f32.mrf.mxu0
    %v346 = vadd.f32 %v256, %v345
    %v347 = vpop.f32.mrf.mxu0
    %v348 = vadd.f32 %v258, %v347
    %349 = vmatmul.bf16.gmra.mxu0 %v299
    %v350 = vpop.f32.mrf.mxu0
    %v351 = vadd.f32 %v261, %v350
    %v352 = vpop.f32.mrf.mxu0
    %v353 = vadd.f32 %v263, %v352
    %354 = vmatmul.bf16.gmra.mxu0 %v302
    %v355 = vpop.f32.mrf.mxu0
    %v356 = vadd.f32 %v266, %v355
    %v357 = vpop.f32.mrf.mxu0
    %v358 = vadd.f32 %v268, %v357
    %359 = vmatmul.bf16.gmra.mxu0 %v305
    %v360 = vpop.f32.mrf.mxu0
    %v361 = vadd.f32 %v271, %v360
    %v362 = vpop.f32.mrf.mxu0
    %v363 = vadd.f32 %v273, %v362
    %364 = vdwg.mxu0
    %v365 = vld [vmem:[#allocation2 + $0x2] sm:$0xff]
    %v366 = vld [vmem:[#allocation2 + $0xa] sm:$0xff]
    %v367 = vld [vmem:[#allocation2 + $0x12] sm:$0xff]
    %v368 = vld [vmem:[#allocation2 + $0x1a] sm:$0xff]
    %v369 = vld [vmem:[#allocation2 + $0x22] sm:$0xff]
    %v370 = vld [vmem:[#allocation2 + $0x2a] sm:$0xff]
    %v371 = vld [vmem:[#allocation2 + $0x32] sm:$0xff]
    %v372 = vld [vmem:[#allocation2 + $0x3a] sm:$0xff]
    %v373 = vpack.c.bf16 %v366, %v365
    %v374 = vpack.c.bf16 %v368, %v367
    %v375 = vpack.c.bf16 %v370, %v369
    %v376 = vpack.c.bf16 %v372, %v371
    %s377 = scalar_lea.vmem %s1, 64
    %v378 = vld [vmem:[%s377] sm:$0xff]
    %v379 = vld [vmem:[%s377 + $0x8] sm:$0xff]
    %v380 = vld [vmem:[%s377 + $0x10] sm:$0xff]
    %v381 = vld [vmem:[%s377 + $0x18] sm:$0xff]
    %v386 = vunpack.c.l.b16 %v378
    %v387 = vunpack.c.h.b16 %v378
    %v388 = vunpack.c.l.b16 %v379
    %v389 = vunpack.c.h.b16 %v379
    %v390 = vunpack.c.l.b16 %v380
    %v391 = vunpack.c.h.b16 %v380
    %v392 = vunpack.c.l.b16 %v381
    %v393 = vunpack.c.h.b16 %v381
    %v394 = vpack.c.b16 %v388, %v386
    %v395 = vpack.c.b16 %v389, %v387
    %v396 = vpack.c.b16 %v392, %v390
    %v397 = vpack.c.b16 %v393, %v391
    %v403 = vsel %vm54, %v373, 0
    %v406 = vsel %vm54, %v374, 0
    %v409 = vsel %vm54, %v375, 0
    %v412 = vsel %vm54, %v376, 0
    %414 = vmatpush.bf16.msra.mxu0 0
    %415 = vmatpush.bf16.msra.mxu0 0
    %416 = vmatpush.bf16.msra.mxu0 0
    %417 = vmatpush.bf16.msra.mxu0 0
    %418 = vmatpush.bf16.msra.mxu0 0
    %419 = vmatpush.bf16.msra.mxu0 0
    %420 = vmatpush.bf16.msra.mxu0 %v396
    %421 = vmatpush.bf16.msra.mxu0 %v394
    %422 = vmatmul.bf16.gmra.mxu0 %v403
    %v423 = vpop.f32.mrf.mxu0
    %v424 = vadd.f32 0.0, %v423
    %v425 = vpop.f32.mrf.mxu0
    %v426 = vadd.f32 0.0, %v425
    %427 = vmatmul.bf16.gmra.mxu0 %v406
    %v428 = vpop.f32.mrf.mxu0
    %v429 = vadd.f32 0.0, %v428
    %v430 = vpop.f32.mrf.mxu0
    %v431 = vadd.f32 0.0, %v430
    %432 = vmatmul.bf16.gmra.mxu0 %v409
    %v433 = vpop.f32.mrf.mxu0
    %v434 = vadd.f32 0.0, %v433
    %v435 = vpop.f32.mrf.mxu0
    %v436 = vadd.f32 0.0, %v435
    %437 = vmatmul.bf16.gmra.mxu0 %v412
    %v438 = vpop.f32.mrf.mxu0
    %v439 = vadd.f32 0.0, %v438
    %v440 = vpop.f32.mrf.mxu0
    %v441 = vadd.f32 0.0, %v440
    %442 = vdwg.mxu0
    %443 = vmatpush.bf16.msra.mxu0 0
    %444 = vmatpush.bf16.msra.mxu0 0
    %445 = vmatpush.bf16.msra.mxu0 0
    %446 = vmatpush.bf16.msra.mxu0 0
    %447 = vmatpush.bf16.msra.mxu0 0
    %448 = vmatpush.bf16.msra.mxu0 0
    %449 = vmatpush.bf16.msra.mxu0 %v397
    %450 = vmatpush.bf16.msra.mxu0 %v395
    %451 = vmatmul.bf16.gmra.mxu0 %v403
    %v452 = vpop.f32.mrf.mxu0
    %v453 = vadd.f32 0.0, %v452
    %v454 = vpop.f32.mrf.mxu0
    %v455 = vadd.f32 0.0, %v454
    %456 = vmatmul.bf16.gmra.mxu0 %v406
    %v457 = vpop.f32.mrf.mxu0
    %v458 = vadd.f32 0.0, %v457
    %v459 = vpop.f32.mrf.mxu0
    %v460 = vadd.f32 0.0, %v459
    %461 = vmatmul.bf16.gmra.mxu0 %v409
    %v462 = vpop.f32.mrf.mxu0
    %v463 = vadd.f32 0.0, %v462
    %v464 = vpop.f32.mrf.mxu0
    %v465 = vadd.f32 0.0, %v464
    %466 = vmatmul.bf16.gmra.mxu0 %v412
    %v467 = vpop.f32.mrf.mxu0
    %v468 = vadd.f32 0.0, %v467
    %v469 = vpop.f32.mrf.mxu0
    %v470 = vadd.f32 0.0, %v469
    %471 = vdwg.mxu0
    %v472 = vadd.f32 %v317, %v424
    %v473 = vadd.f32 %v346, %v453
    %v474 = vadd.f32 %v319, %v426
    %v475 = vadd.f32 %v348, %v455
    %v476 = vadd.f32 %v322, %v429
    %v477 = vadd.f32 %v351, %v458
    %v478 = vadd.f32 %v324, %v431
    %v479 = vadd.f32 %v353, %v460
    %v480 = vadd.f32 %v327, %v434
    %v481 = vadd.f32 %v356, %v463
    %v482 = vadd.f32 %v329, %v436
    %v483 = vadd.f32 %v358, %v465
    %v484 = vadd.f32 %v332, %v439
    %v485 = vadd.f32 %v361, %v468
    %v486 = vadd.f32 %v334, %v441
    %v487 = vadd.f32 %v363, %v470
    %v488 = vld [vmem:[#allocation2 + $0x3] sm:$0xff]
    %v489 = vld [vmem:[#allocation2 + $0xb] sm:$0xff]
    %v490 = vld [vmem:[#allocation2 + $0x13] sm:$0xff]
    %v491 = vld [vmem:[#allocation2 + $0x1b] sm:$0xff]
    %v492 = vld [vmem:[#allocation2 + $0x23] sm:$0xff]
    %v493 = vld [vmem:[#allocation2 + $0x2b] sm:$0xff]
    %v494 = vld [vmem:[#allocation2 + $0x33] sm:$0xff]
    %v495 = vld [vmem:[#allocation2 + $0x3b] sm:$0xff]
    %v496 = vpack.c.bf16 %v489, %v488
    %v497 = vpack.c.bf16 %v491, %v490
    %v498 = vpack.c.bf16 %v493, %v492
    %v499 = vpack.c.bf16 %v495, %v494
    %s500 = scalar_lea.vmem %s1, 96
    %v501 = vld [vmem:[%s500] sm:$0xff]
    %v502 = vld [vmem:[%s500 + $0x8] sm:$0xff]
    %v503 = vld [vmem:[%s500 + $0x10] sm:$0xff]
    %v504 = vld [vmem:[%s500 + $0x18] sm:$0xff]
    %v509 = vunpack.c.l.b16 %v501
    %v510 = vunpack.c.h.b16 %v501
    %v511 = vunpack.c.l.b16 %v502
    %v512 = vunpack.c.h.b16 %v502
    %v513 = vunpack.c.l.b16 %v503
    %v514 = vunpack.c.h.b16 %v503
    %v515 = vunpack.c.l.b16 %v504
    %v516 = vunpack.c.h.b16 %v504
    %v517 = vpack.c.b16 %v511, %v509
    %v518 = vpack.c.b16 %v512, %v510
    %v519 = vpack.c.b16 %v515, %v513
    %v520 = vpack.c.b16 %v516, %v514
    %v526 = vsel %vm54, %v496, 0
    %v529 = vsel %vm54, %v497, 0
    %v532 = vsel %vm54, %v498, 0
    %v535 = vsel %vm54, %v499, 0
    %537 = vmatpush.bf16.msra.mxu0 0
    %538 = vmatpush.bf16.msra.mxu0 0
    %539 = vmatpush.bf16.msra.mxu0 0
    %540 = vmatpush.bf16.msra.mxu0 0
    %541 = vmatpush.bf16.msra.mxu0 0
    %542 = vmatpush.bf16.msra.mxu0 0
    %543 = vmatpush.bf16.msra.mxu0 %v519
    %544 = vmatpush.bf16.msra.mxu0 %v517
    %545 = vmatmul.bf16.gmra.mxu0 %v526
    %v546 = vpop.f32.mrf.mxu0
    %v547 = vadd.f32 0.0, %v546
    %v548 = vpop.f32.mrf.mxu0
    %v549 = vadd.f32 0.0, %v548
    %550 = vmatmul.bf16.gmra.mxu0 %v529
    %v551 = vpop.f32.mrf.mxu0
    %v552 = vadd.f32 0.0, %v551
    %v553 = vpop.f32.mrf.mxu0
    %v554 = vadd.f32 0.0, %v553
    %555 = vmatmul.bf16.gmra.mxu0 %v532
    %v556 = vpop.f32.mrf.mxu0
    %v557 = vadd.f32 0.0, %v556
    %v558 = vpop.f32.mrf.mxu0
    %v559 = vadd.f32 0.0, %v558
    %560 = vmatmul.bf16.gmra.mxu0 %v535
    %v561 = vpop.f32.mrf.mxu0
    %v562 = vadd.f32 0.0, %v561
    %v563 = vpop.f32.mrf.mxu0
    %v564 = vadd.f32 0.0, %v563
    %565 = vdwg.mxu0
    %566 = vmatpush.bf16.msra.mxu0 0
    %567 = vmatpush.bf16.msra.mxu0 0
    %568 = vmatpush.bf16.msra.mxu0 0
    %569 = vmatpush.bf16.msra.mxu0 0
    %570 = vmatpush.bf16.msra.mxu0 0
    %571 = vmatpush.bf16.msra.mxu0 0
    %572 = vmatpush.bf16.msra.mxu0 %v520
    %573 = vmatpush.bf16.msra.mxu0 %v518
    %574 = vmatmul.bf16.gmra.mxu0 %v526
    %v575 = vpop.f32.mrf.mxu0
    %v576 = vadd.f32 0.0, %v575
    %v577 = vpop.f32.mrf.mxu0
    %v578 = vadd.f32 0.0, %v577
    %579 = vmatmul.bf16.gmra.mxu0 %v529
    %v580 = vpop.f32.mrf.mxu0
    %v581 = vadd.f32 0.0, %v580
    %v582 = vpop.f32.mrf.mxu0
    %v583 = vadd.f32 0.0, %v582
    %584 = vmatmul.bf16.gmra.mxu0 %v532
    %v585 = vpop.f32.mrf.mxu0
    %v586 = vadd.f32 0.0, %v585
    %v587 = vpop.f32.mrf.mxu0
    %v588 = vadd.f32 0.0, %v587
    %589 = vmatmul.bf16.gmra.mxu0 %v535
    %v590 = vpop.f32.mrf.mxu0
    %v591 = vadd.f32 0.0, %v590
    %v592 = vpop.f32.mrf.mxu0
    %v593 = vadd.f32 0.0, %v592
    %594 = vdwg.mxu0
    %v595 = vadd.f32 %v472, %v547
    %v596 = vadd.f32 %v473, %v576
    %v597 = vadd.f32 %v474, %v549
    %v598 = vadd.f32 %v475, %v578
    %v599 = vadd.f32 %v476, %v552
    %v600 = vadd.f32 %v477, %v581
    %v601 = vadd.f32 %v478, %v554
    %v602 = vadd.f32 %v479, %v583
    %v603 = vadd.f32 %v480, %v557
    %v604 = vadd.f32 %v481, %v586
    %v605 = vadd.f32 %v482, %v559
    %v606 = vadd.f32 %v483, %v588
    %v607 = vadd.f32 %v484, %v562
    %v608 = vadd.f32 %v485, %v591
    %v609 = vadd.f32 %v486, %v564
    %v610 = vadd.f32 %v487, %v593
    %v611 = vld [vmem:[#allocation2 + $0x4] sm:$0xff]
    %v612 = vld [vmem:[#allocation2 + $0xc] sm:$0xff]
    %v613 = vld [vmem:[#allocation2 + $0x14] sm:$0xff]
    %v614 = vld [vmem:[#allocation2 + $0x1c] sm:$0xff]
    %v615 = vld [vmem:[#allocation2 + $0x24] sm:$0xff]
    %v616 = vld [vmem:[#allocation2 + $0x2c] sm:$0xff]
    %v617 = vld [vmem:[#allocation2 + $0x34] sm:$0xff]
    %v618 = vld [vmem:[#allocation2 + $0x3c] sm:$0xff]
    %v619 = vpack.c.bf16 %v612, %v611
    %v620 = vpack.c.bf16 %v614, %v613
    %v621 = vpack.c.bf16 %v616, %v615
    %v622 = vpack.c.bf16 %v618, %v617
    %s623 = scalar_lea.vmem %s1, 128
    %v624 = vld [vmem:[%s623] sm:$0xff]
    %v625 = vld [vmem:[%s623 + $0x8] sm:$0xff]
    %v626 = vld [vmem:[%s623 + $0x10] sm:$0xff]
    %v627 = vld [vmem:[%s623 + $0x18] sm:$0xff]
    %v632 = vunpack.c.l.b16 %v624
    %v633 = vunpack.c.h.b16 %v624
    %v634 = vunpack.c.l.b16 %v625
    %v635 = vunpack.c.h.b16 %v625
    %v636 = vunpack.c.l.b16 %v626
    %v637 = vunpack.c.h.b16 %v626
    %v638 = vunpack.c.l.b16 %v627
    %v639 = vunpack.c.h.b16 %v627
    %v640 = vpack.c.b16 %v634, %v632
    %v641 = vpack.c.b16 %v635, %v633
    %v642 = vpack.c.b16 %v638, %v636
    %v643 = vpack.c.b16 %v639, %v637
    %v649 = vsel %vm54, %v619, 0
    %v652 = vsel %vm54, %v620, 0
    %v655 = vsel %vm54, %v621, 0
    %v658 = vsel %vm54, %v622, 0
    %660 = vmatpush.bf16.msra.mxu0 0
    %661 = vmatpush.bf16.msra.mxu0 0
    %662 = vmatpush.bf16.msra.mxu0 0
    %663 = vmatpush.bf16.msra.mxu0 0
    %664 = vmatpush.bf16.msra.mxu0 0
    %665 = vmatpush.bf16.msra.mxu0 0
    %666 = vmatpush.bf16.msra.mxu0 %v642
    %667 = vmatpush.bf16.msra.mxu0 %v640
    %668 = vmatmul.bf16.gmra.mxu0 %v649
    %v669 = vpop.f32.mrf.mxu0
    %v670 = vadd.f32 0.0, %v669
    %v671 = vpop.f32.mrf.mxu0
    %v672 = vadd.f32 0.0, %v671
    %673 = vmatmul.bf16.gmra.mxu0 %v652
    %v674 = vpop.f32.mrf.mxu0
    %v675 = vadd.f32 0.0, %v674
    %v676 = vpop.f32.mrf.mxu0
    %v677 = vadd.f32 0.0, %v676
    %678 = vmatmul.bf16.gmra.mxu0 %v655
    %v679 = vpop.f32.mrf.mxu0
    %v680 = vadd.f32 0.0, %v679
    %v681 = vpop.f32.mrf.mxu0
    %v682 = vadd.f32 0.0, %v681
    %683 = vmatmul.bf16.gmra.mxu0 %v658
    %v684 = vpop.f32.mrf.mxu0
    %v685 = vadd.f32 0.0, %v684
    %v686 = vpop.f32.mrf.mxu0
    %v687 = vadd.f32 0.0, %v686
    %688 = vdwg.mxu0
    %689 = vmatpush.bf16.msra.mxu0 0
    %690 = vmatpush.bf16.msra.mxu0 0
    %691 = vmatpush.bf16.msra.mxu0 0
    %692 = vmatpush.bf16.msra.mxu0 0
    %693 = vmatpush.bf16.msra.mxu0 0
    %694 = vmatpush.bf16.msra.mxu0 0
    %695 = vmatpush.bf16.msra.mxu0 %v643
    %696 = vmatpush.bf16.msra.mxu0 %v641
    %697 = vmatmul.bf16.gmra.mxu0 %v649
    %v698 = vpop.f32.mrf.mxu0
    %v699 = vadd.f32 0.0, %v698
    %v700 = vpop.f32.mrf.mxu0
    %v701 = vadd.f32 0.0, %v700
    %702 = vmatmul.bf16.gmra.mxu0 %v652
    %v703 = vpop.f32.mrf.mxu0
    %v704 = vadd.f32 0.0, %v703
    %v705 = vpop.f32.mrf.mxu0
    %v706 = vadd.f32 0.0, %v705
    %707 = vmatmul.bf16.gmra.mxu0 %v655
    %v708 = vpop.f32.mrf.mxu0
    %v709 = vadd.f32 0.0, %v708
    %v710 = vpop.f32.mrf.mxu0
    %v711 = vadd.f32 0.0, %v710
    %712 = vmatmul.bf16.gmra.mxu0 %v658
    %v713 = vpop.f32.mrf.mxu0
    %v714 = vadd.f32 0.0, %v713
    %v715 = vpop.f32.mrf.mxu0
    %v716 = vadd.f32 0.0, %v715
    %717 = vdwg.mxu0
    %v718 = vadd.f32 %v595, %v670
    %v719 = vadd.f32 %v596, %v699
    %v720 = vadd.f32 %v597, %v672
    %v721 = vadd.f32 %v598, %v701
    %v722 = vadd.f32 %v599, %v675
    %v723 = vadd.f32 %v600, %v704
    %v724 = vadd.f32 %v601, %v677
    %v725 = vadd.f32 %v602, %v706
    %v726 = vadd.f32 %v603, %v680
    %v727 = vadd.f32 %v604, %v709
    %v728 = vadd.f32 %v605, %v682
    %v729 = vadd.f32 %v606, %v711
    %v730 = vadd.f32 %v607, %v685
    %v731 = vadd.f32 %v608, %v714
    %v732 = vadd.f32 %v609, %v687
    %v733 = vadd.f32 %v610, %v716
    %v734 = vpack.c.bf16 %v720, %v718
    %v735 = vpack.c.bf16 %v721, %v719
    %v736 = vpack.c.bf16 %v724, %v722
    %v737 = vpack.c.bf16 %v725, %v723
    %v738 = vpack.c.bf16 %v728, %v726
    %v739 = vpack.c.bf16 %v729, %v727
    %v740 = vpack.c.bf16 %v732, %v730
    %v741 = vpack.c.bf16 %v733, %v731
    %v763 = vunpack.c.l.b16 %v68
    %v764 = vunpack.c.l.b16 %v69
    %v765 = vunpack.c.l.b16 %v70
    %v766 = vunpack.c.l.b16 %v71
    %v767 = vunpack.c.l.b16 %v72
    %v768 = vunpack.c.l.b16 %v73
    %v769 = vunpack.c.l.b16 %v74
    %v770 = vunpack.c.l.b16 %v75
    %v771 = vunpack.c.l.b16 %v76
    %v772 = vunpack.c.l.b16 %v77
    %v773 = vunpack.c.l.b16 %v78
    %v774 = vunpack.c.l.b16 %v79
    %v775 = vunpack.c.l.b16 %v80
    %v776 = vunpack.c.l.b16 %v81
    %v777 = vunpack.c.l.b16 %v82
    %v778 = vunpack.c.l.b16 %v83
    %v779 = vunpack.c.l.b16 %v84
    %v780 = vunpack.c.l.b16 %v85
    %v781 = vunpack.c.l.b16 %v86
    %v782 = vunpack.c.l.b16 %v87
    %v783 = vunpack.c.l.b16 %v88
    %v784 = vpack.c.b16 %v764, %v763
    %v785 = vpack.c.b16 %v766, %v765
    %v786 = vpack.c.b16 %v768, %v767
    %v787 = vpack.c.b16 %v770, %v769
    %v788 = vpack.c.b16 %v772, %v771
    %v789 = vpack.c.b16 %v774, %v773
    %v790 = vpack.c.b16 %v776, %v775
    %v791 = vpack.c.b16 %v778, %v777
    %v792 = vpack.c.b16 %v780, %v779
    %v793 = vpack.c.b16 %v782, %v781
    %v794 = vpack.c.b16 %v783, %v783
    %vm805 = vcmask 326656
    %v807 = vsel %vm805, %v735, 0
    %v810 = vsel %vm805, %v737, 0
    %v813 = vsel %vm805, %v739, 0
    %v816 = vsel %vm805, %v741, 0
    %vm818 = vcmask 1043456
    %v820 = vsel %vm818, %v794, 0
    %822 = vmatpush.bf16.msra.mxu0 %v791
    %823 = vmatpush.bf16.msra.mxu0 %v790
    %824 = vmatpush.bf16.msra.mxu0 %v789
    %825 = vmatpush.bf16.msra.mxu0 %v788
    %826 = vmatpush.bf16.msra.mxu0 %v787
    %827 = vmatpush.bf16.msra.mxu0 %v786
    %828 = vmatpush.bf16.msra.mxu0 %v785
    %829 = vmatpush.bf16.msra.mxu0 %v784
    %830 = vmatmul.bf16.gmra.mxu0 %v734
    %v831 = vpop.f32.mrf.mxu0
    %v832 = vadd.f32 0.0, %v831
    %v833 = vpop.f32.mrf.mxu0
    %v834 = vadd.f32 0.0, %v833
    %835 = vmatmul.bf16.gmra.mxu0 %v736
    %v836 = vpop.f32.mrf.mxu0
    %v837 = vadd.f32 0.0, %v836
    %v838 = vpop.f32.mrf.mxu0
    %v839 = vadd.f32 0.0, %v838
    %840 = vmatmul.bf16.gmra.mxu0 %v738
    %v841 = vpop.f32.mrf.mxu0
    %v842 = vadd.f32 0.0, %v841
    %v843 = vpop.f32.mrf.mxu0
    %v844 = vadd.f32 0.0, %v843
    %845 = vmatmul.bf16.gmra.mxu0 %v740
    %v846 = vpop.f32.mrf.mxu0
    %v847 = vadd.f32 0.0, %v846
    %v848 = vpop.f32.mrf.mxu0
    %v849 = vadd.f32 0.0, %v848
    %850 = vdwg.mxu0
    %851 = vmatpush.bf16.msra.mxu0 0
    %852 = vmatpush.bf16.msra.mxu0 0
    %853 = vmatpush.bf16.msra.mxu0 0
    %854 = vmatpush.bf16.msra.mxu0 0
    %855 = vmatpush.bf16.msra.mxu0 0
    %856 = vmatpush.bf16.msra.mxu0 %v820
    %857 = vmatpush.bf16.msra.mxu0 %v793
    %858 = vmatpush.bf16.msra.mxu0 %v792
    %859 = vmatmul.bf16.gmra.mxu0 %v807
    %v860 = vpop.f32.mrf.mxu0
    %v861 = vadd.f32 %v832, %v860
    %v862 = vpop.f32.mrf.mxu0
    %v863 = vadd.f32 %v834, %v862
    %864 = vmatmul.bf16.gmra.mxu0 %v810
    %v865 = vpop.f32.mrf.mxu0
    %v866 = vadd.f32 %v837, %v865
    %v867 = vpop.f32.mrf.mxu0
    %v868 = vadd.f32 %v839, %v867
    %869 = vmatmul.bf16.gmra.mxu0 %v813
    %v870 = vpop.f32.mrf.mxu0
    %v871 = vadd.f32 %v842, %v870
    %v872 = vpop.f32.mrf.mxu0
    %v873 = vadd.f32 %v844, %v872
    %874 = vmatmul.bf16.gmra.mxu0 %v816
    %v875 = vpop.f32.mrf.mxu0
    %v876 = vadd.f32 %v847, %v875
    %v877 = vpop.f32.mrf.mxu0
    %v878 = vadd.f32 %v849, %v877
    %879 = vdwg.mxu0
    %v901 = vunpack.c.l.b16 %v90
    %v902 = vunpack.c.l.b16 %v91
    %v903 = vunpack.c.l.b16 %v92
    %v904 = vunpack.c.l.b16 %v93
    %v905 = vunpack.c.l.b16 %v94
    %v906 = vunpack.c.l.b16 %v95
    %v907 = vunpack.c.l.b16 %v96
    %v908 = vunpack.c.l.b16 %v97
    %v909 = vunpack.c.l.b16 %v98
    %v910 = vunpack.c.l.b16 %v99
    %v911 = vunpack.c.l.b16 %v100
    %v912 = vunpack.c.l.b16 %v101
    %v913 = vunpack.c.l.b16 %v102
    %v914 = vunpack.c.l.b16 %v103
    %v915 = vunpack.c.l.b16 %v104
    %v916 = vunpack.c.l.b16 %v105
    %v917 = vunpack.c.l.b16 %v106
    %v918 = vunpack.c.l.b16 %v107
    %v919 = vunpack.c.l.b16 %v108
    %v920 = vunpack.c.l.b16 %v109
    %v921 = vunpack.c.l.b16 %v110
    %v922 = vpack.c.b16 %v902, %v901
    %v923 = vpack.c.b16 %v904, %v903
    %v924 = vpack.c.b16 %v906, %v905
    %v925 = vpack.c.b16 %v908, %v907
    %v926 = vpack.c.b16 %v910, %v909
    %v927 = vpack.c.b16 %v912, %v911
    %v928 = vpack.c.b16 %v914, %v913
    %v929 = vpack.c.b16 %v916, %v915
    %v930 = vpack.c.b16 %v918, %v917
    %v931 = vpack.c.b16 %v920, %v919
    %v932 = vpack.c.b16 %v921, %v921
    %v944 = vsel %vm818, %v932, 0
    %946 = vmatpush.bf16.msra.mxu0 %v929
    %947 = vmatpush.bf16.msra.mxu0 %v928
    %948 = vmatpush.bf16.msra.mxu0 %v927
    %949 = vmatpush.bf16.msra.mxu0 %v926
    %950 = vmatpush.bf16.msra.mxu0 %v925
    %951 = vmatpush.bf16.msra.mxu0 %v924
    %952 = vmatpush.bf16.msra.mxu0 %v923
    %953 = vmatpush.bf16.msra.mxu0 %v922
    %954 = vmatmul.bf16.gmra.mxu0 %v734
    %v955 = vpop.f32.mrf.mxu0
    %v956 = vadd.f32 0.0, %v955
    %v957 = vpop.f32.mrf.mxu0
    %v958 = vadd.f32 0.0, %v957
    %959 = vmatmul.bf16.gmra.mxu0 %v736
    %v960 = vpop.f32.mrf.mxu0
    %v961 = vadd.f32 0.0, %v960
    %v962 = vpop.f32.mrf.mxu0
    %v963 = vadd.f32 0.0, %v962
    %964 = vmatmul.bf16.gmra.mxu0 %v738
    %v965 = vpop.f32.mrf.mxu0
    %v966 = vadd.f32 0.0, %v965
    %v967 = vpop.f32.mrf.mxu0
    %v968 = vadd.f32 0.0, %v967
    %969 = vmatmul.bf16.gmra.mxu0 %v740
    %v970 = vpop.f32.mrf.mxu0
    %v971 = vadd.f32 0.0, %v970
    %v972 = vpop.f32.mrf.mxu0
    %v973 = vadd.f32 0.0, %v972
    %974 = vdwg.mxu0
    %975 = vmatpush.bf16.msra.mxu0 0
    %976 = vmatpush.bf16.msra.mxu0 0
    %977 = vmatpush.bf16.msra.mxu0 0
    %978 = vmatpush.bf16.msra.mxu0 0
    %979 = vmatpush.bf16.msra.mxu0 0
    %980 = vmatpush.bf16.msra.mxu0 %v944
    %981 = vmatpush.bf16.msra.mxu0 %v931
    %982 = vmatpush.bf16.msra.mxu0 %v930
    %983 = vmatmul.bf16.gmra.mxu0 %v807
    %v984 = vpop.f32.mrf.mxu0
    %v985 = vadd.f32 %v956, %v984
    %v986 = vpop.f32.mrf.mxu0
    %v987 = vadd.f32 %v958, %v986
    %988 = vmatmul.bf16.gmra.mxu0 %v810
    %v989 = vpop.f32.mrf.mxu0
    %v990 = vadd.f32 %v961, %v989
    %v991 = vpop.f32.mrf.mxu0
    %v992 = vadd.f32 %v963, %v991
    %993 = vmatmul.bf16.gmra.mxu0 %v813
    %v994 = vpop.f32.mrf.mxu0
    %v995 = vadd.f32 %v966, %v994
    %v996 = vpop.f32.mrf.mxu0
    %v997 = vadd.f32 %v968, %v996
    %998 = vmatmul.bf16.gmra.mxu0 %v816
    %v999 = vpop.f32.mrf.mxu0
    %v1000 = vadd.f32 %v971, %v999
    %v1001 = vpop.f32.mrf.mxu0
    %v1002 = vadd.f32 %v973, %v1001
    %1003 = vdwg.mxu0
    %v1004 = vmax.f32 %v861, %v985
    %v1005 = vmax.f32 %v863, %v987
    %v1006 = vmax.f32 %v866, %v990
    %v1007 = vmax.f32 %v868, %v992
    %v1008 = vmax.f32 %v871, %v995
    %v1009 = vmax.f32 %v873, %v997
    %v1010 = vmax.f32 %v876, %v1000
    %v1011 = vmax.f32 %v878, %v1002
    %v1013 = vperm.slane %v66, 0
    %v1015 = vadd.f32 %v1004, %v1013
    %v1016 = vadd.f32 %v1005, %v1013
    %v1017 = vadd.f32 %v1006, %v1013
    %v1018 = vadd.f32 %v1007, %v1013
    %v1019 = vadd.f32 %v1008, %v1013
    %v1020 = vadd.f32 %v1009, %v1013
    %v1021 = vadd.f32 %v1010, %v1013
    %v1022 = vadd.f32 %v1011, %v1013
    %v1023 = vmax.f32 %v1015, 0.0
    %v1024 = vmax.f32 %v1016, 0.0
    %v1025 = vmax.f32 %v1017, 0.0
    %v1026 = vmax.f32 %v1018, 0.0
    %v1027 = vmax.f32 %v1019, 0.0
    %v1028 = vmax.f32 %v1020, 0.0
    %v1029 = vmax.f32 %v1021, 0.0
    %v1030 = vmax.f32 %v1022, 0.0
    %1031 = vst.msk [vmem:[#allocation3] sm:$0xff] %vm64, %v1023
    %1032 = vst.msk [vmem:[#allocation3 + $0x8] sm:$0xff] %vm64, %v1024
    %1033 = vst.msk [vmem:[#allocation3 + $0x10] sm:$0xff] %vm64, %v1025
    %1034 = vst.msk [vmem:[#allocation3 + $0x18] sm:$0xff] %vm64, %v1026
    %1035 = vst.msk [vmem:[#allocation3 + $0x20] sm:$0xff] %vm64, %v1027
    %1036 = vst.msk [vmem:[#allocation3 + $0x28] sm:$0xff] %vm64, %v1028
    %1037 = vst.msk [vmem:[#allocation3 + $0x30] sm:$0xff] %vm64, %v1029
    %1038 = vst.msk [vmem:[#allocation3 + $0x38] sm:$0xff] %vm64, %v1030
    %v1039 = vld [vmem:[#allocation3] ss:$2 sm:$0xff]
    %s1040 = scalar_lea.vmem [#allocation3], 16
    %v1041 = vld [vmem:[%s1040] ss:$2 sm:$0xff]
    %s1042 = scalar_lea.vmem [#allocation3], 32
    %v1043 = vld [vmem:[%s1042] ss:$2 sm:$0xff]
    %s1044 = scalar_lea.vmem [#allocation3], 48
    %v1045 = vld [vmem:[%s1044] ss:$2 sm:$0xff]
    %s1046 = scalar_lea.vmem [#allocation3], 1
    %v1047 = vld [vmem:[%s1046] ss:$2 sm:$0xff]
    %s1048 = scalar_lea.vmem [#allocation3], 17
    %v1049 = vld [vmem:[%s1048] ss:$2 sm:$0xff]
    %s1050 = scalar_lea.vmem [#allocation3], 33
    %v1051 = vld [vmem:[%s1050] ss:$2 sm:$0xff]
    %s1052 = scalar_lea.vmem [#allocation3], 49
    %v1053 = vld [vmem:[%s1052] ss:$2 sm:$0xff]
    %v1054 = vmax.f32 %v1039, %v1047
    %v1055 = vmax.f32 %v1041, %v1049
    %v1056 = vmax.f32 %v1043, %v1051
    %v1057 = vmax.f32 %v1045, %v1053
    %v1058 = vpack.c.bf16 %v1055, %v1054
    %v1059 = vpack.c.bf16 %v1057, %v1056
    %v1060 = vld [vmem:[%s4] sm:$0xff]
    %v1061 = vld [vmem:[%s4 + $0x8] sm:$0xff]
    %v1062 = vld [vmem:[%s4 + $0x10] sm:$0xff]
    %v1063 = vld [vmem:[%s4 + $0x18] sm:$0xff]
    %v1064 = vld [vmem:[%s4 + $0x20] sm:$0xff]
    %v1065 = vld [vmem:[%s4 + $0x28] sm:$0xff]
    %v1066 = vld [vmem:[%s4 + $0x30] sm:$0xff]
    %v1067 = vld [vmem:[%s4 + $0x38] sm:$0xff]
    %v1068 = vld [vmem:[%s4 + $0x40] sm:$0xff]
    %v1069 = vld [vmem:[%s4 + $0x48] sm:$0xff]
    %v1070 = vld [vmem:[%s4 + $0x50] sm:$0x33]
    %s1071 = scalar_lea.vmem [#allocation3], 2
    %v1072 = vld [vmem:[%s1071] ss:$2 sm:$0xff]
    %s1073 = scalar_lea.vmem [#allocation3], 18
    %v1074 = vld [vmem:[%s1073] ss:$2 sm:$0xff]
    %s1075 = scalar_lea.vmem [#allocation3], 34
    %v1076 = vld [vmem:[%s1075] ss:$2 sm:$0xff]
    %s1077 = scalar_lea.vmem [#allocation3], 50
    %v1078 = vld [vmem:[%s1077] ss:$2 sm:$0xff]
    %s1079 = scalar_lea.vmem [#allocation3], 3
    %v1080 = vld [vmem:[%s1079] ss:$2 sm:$0xff]
    %s1081 = scalar_lea.vmem [#allocation3], 19
    %v1082 = vld [vmem:[%s1081] ss:$2 sm:$0xff]
    %s1083 = scalar_lea.vmem [#allocation3], 35
    %v1084 = vld [vmem:[%s1083] ss:$2 sm:$0xff]
    %s1085 = scalar_lea.vmem [#allocation3], 51
    %v1086 = vld [vmem:[%s1085] ss:$2 sm:$0xff]
    %v1087 = vmax.f32 %v1072, %v1080
    %v1088 = vmax.f32 %v1074, %v1082
    %v1089 = vmax.f32 %v1076, %v1084
    %v1090 = vmax.f32 %v1078, %v1086
    %v1091 = vpack.c.bf16 %v1088, %v1087
    %v1092 = vpack.c.bf16 %v1090, %v1089
    %s1093 = scalar_lea.vmem %s4, 88
    %v1094 = vld [vmem:[%s1093] sm:$0xff]
    %v1095 = vld [vmem:[%s1093 + $0x8] sm:$0xff]
    %v1096 = vld [vmem:[%s1093 + $0x10] sm:$0xff]
    %v1097 = vld [vmem:[%s1093 + $0x18] sm:$0xff]
    %v1098 = vld [vmem:[%s1093 + $0x20] sm:$0xff]
    %v1099 = vld [vmem:[%s1093 + $0x28] sm:$0xff]
    %v1100 = vld [vmem:[%s1093 + $0x30] sm:$0xff]
    %v1101 = vld [vmem:[%s1093 + $0x38] sm:$0xff]
    %v1102 = vld [vmem:[%s1093 + $0x40] sm:$0xff]
    %v1103 = vld [vmem:[%s1093 + $0x48] sm:$0xff]
    %v1104 = vld [vmem:[%s1093 + $0x50] sm:$0x33]
    %v1116 = vunpack.c.l.b16 %v1094
    %v1117 = vunpack.c.h.b16 %v1094
    %v1118 = vunpack.c.l.b16 %v1095
    %v1119 = vunpack.c.h.b16 %v1095
    %v1120 = vunpack.c.l.b16 %v1096
    %v1121 = vunpack.c.h.b16 %v1096
    %v1122 = vunpack.c.l.b16 %v1097
    %v1123 = vunpack.c.h.b16 %v1097
    %v1124 = vunpack.c.l.b16 %v1098
    %v1125 = vunpack.c.h.b16 %v1098
    %v1126 = vunpack.c.l.b16 %v1099
    %v1127 = vunpack.c.h.b16 %v1099
    %v1128 = vunpack.c.l.b16 %v1100
    %v1129 = vunpack.c.h.b16 %v1100
    %v1130 = vunpack.c.l.b16 %v1101
    %v1131 = vunpack.c.h.b16 %v1101
    %v1132 = vunpack.c.l.b16 %v1102
    %v1133 = vunpack.c.h.b16 %v1102
    %v1134 = vunpack.c.l.b16 %v1103
    %v1135 = vunpack.c.h.b16 %v1103
    %v1136 = vunpack.c.l.b16 %v1104
    %v1137 = vunpack.c.h.b16 %v1104
    %v1138 = vpack.c.b16 %v1118, %v1116
    %v1139 = vpack.c.b16 %v1119, %v1117
    %v1140 = vpack.c.b16 %v1122, %v1120
    %v1141 = vpack.c.b16 %v1123, %v1121
    %v1142 = vpack.c.b16 %v1126, %v1124
    %v1143 = vpack.c.b16 %v1127, %v1125
    %v1144 = vpack.c.b16 %v1130, %v1128
    %v1145 = vpack.c.b16 %v1131, %v1129
    %v1146 = vpack.c.b16 %v1134, %v1132
    %v1147 = vpack.c.b16 %v1135, %v1133
    %v1148 = vpack.c.b16 %v1136, %v1136
    %v1149 = vpack.c.b16 %v1137, %v1137
    %v1161 = vsel %vm64, %v1091, 0
    %v1164 = vsel %vm64, %v1092, 0
    %vm1166 = vcmask 1041408
    %v1168 = vsel %vm1166, %v1148, 0
    %v1171 = vsel %vm1166, %v1149, 0
    %1173 = vmatpush.bf16.msra.mxu0 0
    %1174 = vmatpush.bf16.msra.mxu0 0
    %1175 = vmatpush.bf16.msra.mxu0 %v1168
    %1176 = vmatpush.bf16.msra.mxu0 %v1146
    %1177 = vmatpush.bf16.msra.mxu0 %v1144
    %1178 = vmatpush.bf16.msra.mxu0 %v1142
    %1179 = vmatpush.bf16.msra.mxu0 %v1140
    %1180 = vmatpush.bf16.msra.mxu0 %v1138
    %1181 = vmatmul.bf16.gmra.mxu0 %v1161
    %v1182 = vpop.f32.mrf.mxu0
    %v1183 = vadd.f32 0.0, %v1182
    %v1184 = vpop.f32.mrf.mxu0
    %v1185 = vadd.f32 0.0, %v1184
    %1186 = vmatmul.bf16.gmra.mxu0 %v1164
    %v1187 = vpop.f32.mrf.mxu0
    %v1188 = vadd.f32 0.0, %v1187
    %v1189 = vpop.f32.mrf.mxu0
    %v1190 = vadd.f32 0.0, %v1189
    %1191 = vdwg.mxu0
    %1192 = vmatpush.bf16.msra.mxu0 0
    %1193 = vmatpush.bf16.msra.mxu0 0
    %1194 = vmatpush.bf16.msra.mxu0 %v1171
    %1195 = vmatpush.bf16.msra.mxu0 %v1147
    %1196 = vmatpush.bf16.msra.mxu0 %v1145
    %1197 = vmatpush.bf16.msra.mxu0 %v1143
    %1198 = vmatpush.bf16.msra.mxu0 %v1141
    %1199 = vmatpush.bf16.msra.mxu0 %v1139
    %1200 = vmatmul.bf16.gmra.mxu0 %v1161
    %v1201 = vpop.f32.mrf.mxu0
    %v1202 = vadd.f32 0.0, %v1201
    %v1203 = vpop.f32.mrf.mxu0
    %v1204 = vadd.f32 0.0, %v1203
    %1205 = vmatmul.bf16.gmra.mxu0 %v1164
    %v1206 = vpop.f32.mrf.mxu0
    %v1207 = vadd.f32 0.0, %v1206
    %v1208 = vpop.f32.mrf.mxu0
    %v1209 = vadd.f32 0.0, %v1208
    %1210 = vdwg.mxu0
    %v1222 = vunpack.c.l.b16 %v1060
    %v1223 = vunpack.c.h.b16 %v1060
    %v1224 = vunpack.c.l.b16 %v1061
    %v1225 = vunpack.c.h.b16 %v1061
    %v1226 = vunpack.c.l.b16 %v1062
    %v1227 = vunpack.c.h.b16 %v1062
    %v1228 = vunpack.c.l.b16 %v1063
    %v1229 = vunpack.c.h.b16 %v1063
    %v1230 = vunpack.c.l.b16 %v1064
    %v1231 = vunpack.c.h.b16 %v1064
    %v1232 = vunpack.c.l.b16 %v1065
    %v1233 = vunpack.c.h.b16 %v1065
    %v1234 = vunpack.c.l.b16 %v1066
    %v1235 = vunpack.c.h.b16 %v1066
    %v1236 = vunpack.c.l.b16 %v1067
    %v1237 = vunpack.c.h.b16 %v1067
    %v1238 = vunpack.c.l.b16 %v1068
    %v1239 = vunpack.c.h.b16 %v1068
    %v1240 = vunpack.c.l.b16 %v1069
    %v1241 = vunpack.c.h.b16 %v1069
    %v1242 = vunpack.c.l.b16 %v1070
    %v1243 = vunpack.c.h.b16 %v1070
    %v1244 = vpack.c.b16 %v1224, %v1222
    %v1245 = vpack.c.b16 %v1225, %v1223
    %v1246 = vpack.c.b16 %v1228, %v1226
    %v1247 = vpack.c.b16 %v1229, %v1227
    %v1248 = vpack.c.b16 %v1232, %v1230
    %v1249 = vpack.c.b16 %v1233, %v1231
    %v1250 = vpack.c.b16 %v1236, %v1234
    %v1251 = vpack.c.b16 %v1237, %v1235
    %v1252 = vpack.c.b16 %v1240, %v1238
    %v1253 = vpack.c.b16 %v1241, %v1239
    %v1254 = vpack.c.b16 %v1242, %v1242
    %v1255 = vpack.c.b16 %v1243, %v1243
    %v1267 = vsel %vm64, %v1058, 0
    %v1270 = vsel %vm64, %v1059, 0
    %v1273 = vsel %vm1166, %v1254, 0
    %v1276 = vsel %vm1166, %v1255, 0
    %1278 = vmatpush.bf16.msra.mxu0 0
    %1279 = vmatpush.bf16.msra.mxu0 0
    %1280 = vmatpush.bf16.msra.mxu0 %v1273
    %1281 = vmatpush.bf16.msra.mxu0 %v1252
    %1282 = vmatpush.bf16.msra.mxu0 %v1250
    %1283 = vmatpush.bf16.msra.mxu0 %v1248
    %1284 = vmatpush.bf16.msra.mxu0 %v1246
    %1285 = vmatpush.bf16.msra.mxu0 %v1244
    %1286 = vmatmul.bf16.gmra.mxu0 %v1267
    %v1287 = vpop.f32.mrf.mxu0
    %v1288 = vadd.f32 %v1183, %v1287
    %v1289 = vpop.f32.mrf.mxu0
    %v1290 = vadd.f32 %v1185, %v1289
    %1291 = vmatmul.bf16.gmra.mxu0 %v1270
    %v1292 = vpop.f32.mrf.mxu0
    %v1293 = vadd.f32 %v1188, %v1292
    %v1294 = vpop.f32.mrf.mxu0
    %v1295 = vadd.f32 %v1190, %v1294
    %1296 = vdwg.mxu0
    %1297 = vmatpush.bf16.msra.mxu0 0
    %1298 = vmatpush.bf16.msra.mxu0 0
    %1299 = vmatpush.bf16.msra.mxu0 %v1276
    %1300 = vmatpush.bf16.msra.mxu0 %v1253
    %1301 = vmatpush.bf16.msra.mxu0 %v1251
    %1302 = vmatpush.bf16.msra.mxu0 %v1249
    %1303 = vmatpush.bf16.msra.mxu0 %v1247
    %1304 = vmatpush.bf16.msra.mxu0 %v1245
    %1305 = vmatmul.bf16.gmra.mxu0 %v1267
    %v1306 = vpop.f32.mrf.mxu0
    %v1307 = vadd.f32 %v1202, %v1306
    %v1308 = vpop.f32.mrf.mxu0
    %v1309 = vadd.f32 %v1204, %v1308
    %1310 = vmatmul.bf16.gmra.mxu0 %v1270
    %v1311 = vpop.f32.mrf.mxu0
    %v1312 = vadd.f32 %v1207, %v1311
    %v1313 = vpop.f32.mrf.mxu0
    %v1314 = vadd.f32 %v1209, %v1313
    %1315 = vdwg.mxu0
    %s1316 = scalar_lea.vmem [#allocation3], 4
    %v1317 = vld [vmem:[%s1316] ss:$2 sm:$0xff]
    %s1318 = scalar_lea.vmem [#allocation3], 20
    %v1319 = vld [vmem:[%s1318] ss:$2 sm:$0xff]
    %s1320 = scalar_lea.vmem [#allocation3], 36
    %v1321 = vld [vmem:[%s1320] ss:$2 sm:$0xff]
    %s1322 = scalar_lea.vmem [#allocation3], 52
    %v1323 = vld [vmem:[%s1322] ss:$2 sm:$0xff]
    %s1324 = scalar_lea.vmem [#allocation3], 5
    %v1325 = vld [vmem:[%s1324] ss:$2 sm:$0xff]
    %s1326 = scalar_lea.vmem [#allocation3], 21
    %v1327 = vld [vmem:[%s1326] ss:$2 sm:$0xff]
    %s1328 = scalar_lea.vmem [#allocation3], 37
    %v1329 = vld [vmem:[%s1328] ss:$2 sm:$0xff]
    %s1330 = scalar_lea.vmem [#allocation3], 53
    %v1331 = vld [vmem:[%s1330] ss:$2 sm:$0xff]
    %v1332 = vmax.f32 %v1317, %v1325
    %v1333 = vmax.f32 %v1319, %v1327
    %v1334 = vmax.f32 %v1321, %v1329
    %v1335 = vmax.f32 %v1323, %v1331
    %v1336 = vpack.c.bf16 %v1333, %v1332
    %v1337 = vpack.c.bf16 %v1335, %v1334
    %s1338 = scalar_lea.vmem %s4, 176
    %v1339 = vld [vmem:[%s1338] sm:$0xff]
    %v1340 = vld [vmem:[%s1338 + $0x8] sm:$0xff]
    %v1341 = vld [vmem:[%s1338 + $0x10] sm:$0xff]
    %v1342 = vld [vmem:[%s1338 + $0x18] sm:$0xff]
    %v1343 = vld [vmem:[%s1338 + $0x20] sm:$0xff]
    %v1344 = vld [vmem:[%s1338 + $0x28] sm:$0xff]
    %v1345 = vld [vmem:[%s1338 + $0x30] sm:$0xff]
    %v1346 = vld [vmem:[%s1338 + $0x38] sm:$0xff]
    %v1347 = vld [vmem:[%s1338 + $0x40] sm:$0xff]
    %v1348 = vld [vmem:[%s1338 + $0x48] sm:$0xff]
    %v1349 = vld [vmem:[%s1338 + $0x50] sm:$0x33]
    %v1361 = vunpack.c.l.b16 %v1339
    %v1362 = vunpack.c.h.b16 %v1339
    %v1363 = vunpack.c.l.b16 %v1340
    %v1364 = vunpack.c.h.b16 %v1340
    %v1365 = vunpack.c.l.b16 %v1341
    %v1366 = vunpack.c.h.b16 %v1341
    %v1367 = vunpack.c.l.b16 %v1342
    %v1368 = vunpack.c.h.b16 %v1342
    %v1369 = vunpack.c.l.b16 %v1343
    %v1370 = vunpack.c.h.b16 %v1343
    %v1371 = vunpack.c.l.b16 %v1344
    %v1372 = vunpack.c.h.b16 %v1344
    %v1373 = vunpack.c.l.b16 %v1345
    %v1374 = vunpack.c.h.b16 %v1345
    %v1375 = vunpack.c.l.b16 %v1346
    %v1376 = vunpack.c.h.b16 %v1346
    %v1377 = vunpack.c.l.b16 %v1347
    %v1378 = vunpack.c.h.b16 %v1347
    %v1379 = vunpack.c.l.b16 %v1348
    %v1380 = vunpack.c.h.b16 %v1348
    %v1381 = vunpack.c.l.b16 %v1349
    %v1382 = vunpack.c.h.b16 %v1349
    %v1383 = vpack.c.b16 %v1363, %v1361
    %v1384 = vpack.c.b16 %v1364, %v1362
    %v1385 = vpack.c.b16 %v1367, %v1365
    %v1386 = vpack.c.b16 %v1368, %v1366
    %v1387 = vpack.c.b16 %v1371, %v1369
    %v1388 = vpack.c.b16 %v1372, %v1370
    %v1389 = vpack.c.b16 %v1375, %v1373
    %v1390 = vpack.c.b16 %v1376, %v1374
    %v1391 = vpack.c.b16 %v1379, %v1377
    %v1392 = vpack.c.b16 %v1380, %v1378
    %v1393 = vpack.c.b16 %v1381, %v1381
    %v1394 = vpack.c.b16 %v1382, %v1382
    %v1406 = vsel %vm64, %v1336, 0
    %v1409 = vsel %vm64, %v1337, 0
    %v1412 = vsel %vm1166, %v1393, 0
    %v1415 = vsel %vm1166, %v1394, 0
    %1417 = vmatpush.bf16.msra.mxu0 0
    %1418 = vmatpush.bf16.msra.mxu0 0
    %1419 = vmatpush.bf16.msra.mxu0 %v1412
    %1420 = vmatpush.bf16.msra.mxu0 %v1391
    %1421 = vmatpush.bf16.msra.mxu0 %v1389
    %1422 = vmatpush.bf16.msra.mxu0 %v1387
    %1423 = vmatpush.bf16.msra.mxu0 %v1385
    %1424 = vmatpush.bf16.msra.mxu0 %v1383
    %1425 = vmatmul.bf16.gmra.mxu0 %v1406
    %v1426 = vpop.f32.mrf.mxu0
    %v1427 = vadd.f32 0.0, %v1426
    %v1428 = vpop.f32.mrf.mxu0
    %v1429 = vadd.f32 0.0, %v1428
    %1430 = vmatmul.bf16.gmra.mxu0 %v1409
    %v1431 = vpop.f32.mrf.mxu0
    %v1432 = vadd.f32 0.0, %v1431
    %v1433 = vpop.f32.mrf.mxu0
    %v1434 = vadd.f32 0.0, %v1433
    %1435 = vdwg.mxu0
    %1436 = vmatpush.bf16.msra.mxu0 0
    %1437 = vmatpush.bf16.msra.mxu0 0
    %1438 = vmatpush.bf16.msra.mxu0 %v1415
    %1439 = vmatpush.bf16.msra.mxu0 %v1392
    %1440 = vmatpush.bf16.msra.mxu0 %v1390
    %1441 = vmatpush.bf16.msra.mxu0 %v1388
    %1442 = vmatpush.bf16.msra.mxu0 %v1386
    %1443 = vmatpush.bf16.msra.mxu0 %v1384
    %1444 = vmatmul.bf16.gmra.mxu0 %v1406
    %v1445 = vpop.f32.mrf.mxu0
    %v1446 = vadd.f32 0.0, %v1445
    %v1447 = vpop.f32.mrf.mxu0
    %v1448 = vadd.f32 0.0, %v1447
    %1449 = vmatmul.bf16.gmra.mxu0 %v1409
    %v1450 = vpop.f32.mrf.mxu0
    %v1451 = vadd.f32 0.0, %v1450
    %v1452 = vpop.f32.mrf.mxu0
    %v1453 = vadd.f32 0.0, %v1452
    %1454 = vdwg.mxu0
    %v1455 = vadd.f32 %v1288, %v1427
    %v1456 = vadd.f32 %v1307, %v1446
    %v1457 = vadd.f32 %v1290, %v1429
    %v1458 = vadd.f32 %v1309, %v1448
    %v1459 = vadd.f32 %v1293, %v1432
    %v1460 = vadd.f32 %v1312, %v1451
    %v1461 = vadd.f32 %v1295, %v1434
    %v1462 = vadd.f32 %v1314, %v1453
    %s1463 = scalar_lea.vmem [#allocation3], 6
    %v1464 = vld [vmem:[%s1463] ss:$2 sm:$0xff]
    %s1465 = scalar_lea.vmem [#allocation3], 22
    %v1466 = vld [vmem:[%s1465] ss:$2 sm:$0xff]
    %s1467 = scalar_lea.vmem [#allocation3], 38
    %v1468 = vld [vmem:[%s1467] ss:$2 sm:$0xff]
    %s1469 = scalar_lea.vmem [#allocation3], 54
    %v1470 = vld [vmem:[%s1469] ss:$2 sm:$0xff]
    %s1471 = scalar_lea.vmem [#allocation3], 7
    %v1472 = vld [vmem:[%s1471] ss:$2 sm:$0xff]
    %s1473 = scalar_lea.vmem [#allocation3], 23
    %v1474 = vld [vmem:[%s1473] ss:$2 sm:$0xff]
    %s1475 = scalar_lea.vmem [#allocation3], 39
    %v1476 = vld [vmem:[%s1475] ss:$2 sm:$0xff]
    %s1477 = scalar_lea.vmem [#allocation3], 55
    %v1478 = vld [vmem:[%s1477] ss:$2 sm:$0xff]
    %v1479 = vmax.f32 %v1464, %v1472
    %v1480 = vmax.f32 %v1466, %v1474
    %v1481 = vmax.f32 %v1468, %v1476
    %v1482 = vmax.f32 %v1470, %v1478
    %v1483 = vpack.c.bf16 %v1480, %v1479
    %v1484 = vpack.c.bf16 %v1482, %v1481
    %s1485 = scalar_lea.vmem %s4, 264
    %v1486 = vld [vmem:[%s1485] sm:$0xff]
    %v1487 = vld [vmem:[%s1485 + $0x8] sm:$0xff]
    %v1488 = vld [vmem:[%s1485 + $0x10] sm:$0xff]
    %v1489 = vld [vmem:[%s1485 + $0x18] sm:$0xff]
    %v1490 = vld [vmem:[%s1485 + $0x20] sm:$0xff]
    %v1491 = vld [vmem:[%s1485 + $0x28] sm:$0xff]
    %v1492 = vld [vmem:[%s1485 + $0x30] sm:$0xff]
    %v1493 = vld [vmem:[%s1485 + $0x38] sm:$0xff]
    %v1494 = vld [vmem:[%s1485 + $0x40] sm:$0xff]
    %v1495 = vld [vmem:[%s1485 + $0x48] sm:$0xff]
    %v1496 = vld [vmem:[%s1485 + $0x50] sm:$0x33]
    %v1508 = vunpack.c.l.b16 %v1486
    %v1509 = vunpack.c.h.b16 %v1486
    %v1510 = vunpack.c.l.b16 %v1487
    %v1511 = vunpack.c.h.b16 %v1487
    %v1512 = vunpack.c.l.b16 %v1488
    %v1513 = vunpack.c.h.b16 %v1488
    %v1514 = vunpack.c.l.b16 %v1489
    %v1515 = vunpack.c.h.b16 %v1489
    %v1516 = vunpack.c.l.b16 %v1490
    %v1517 = vunpack.c.h.b16 %v1490
    %v1518 = vunpack.c.l.b16 %v1491
    %v1519 = vunpack.c.h.b16 %v1491
    %v1520 = vunpack.c.l.b16 %v1492
    %v1521 = vunpack.c.h.b16 %v1492
    %v1522 = vunpack.c.l.b16 %v1493
    %v1523 = vunpack.c.h.b16 %v1493
    %v1524 = vunpack.c.l.b16 %v1494
    %v1525 = vunpack.c.h.b16 %v1494
    %v1526 = vunpack.c.l.b16 %v1495
    %v1527 = vunpack.c.h.b16 %v1495
    %v1528 = vunpack.c.l.b16 %v1496
    %v1529 = vunpack.c.h.b16 %v1496
    %v1530 = vpack.c.b16 %v1510, %v1508
    %v1531 = vpack.c.b16 %v1511, %v1509
    %v1532 = vpack.c.b16 %v1514, %v1512
    %v1533 = vpack.c.b16 %v1515, %v1513
    %v1534 = vpack.c.b16 %v1518, %v1516
    %v1535 = vpack.c.b16 %v1519, %v1517
    %v1536 = vpack.c.b16 %v1522, %v1520
    %v1537 = vpack.c.b16 %v1523, %v1521
    %v1538 = vpack.c.b16 %v1526, %v1524
    %v1539 = vpack.c.b16 %v1527, %v1525
    %v1540 = vpack.c.b16 %v1528, %v1528
    %v1541 = vpack.c.b16 %v1529, %v1529
    %v1553 = vsel %vm64, %v1483, 0
    %v1556 = vsel %vm64, %v1484, 0
    %v1559 = vsel %vm1166, %v1540, 0
    %v1562 = vsel %vm1166, %v1541, 0
    %1564 = vmatpush.bf16.msra.mxu0 0
    %1565 = vmatpush.bf16.msra.mxu0 0
    %1566 = vmatpush.bf16.msra.mxu0 %v1559
    %1567 = vmatpush.bf16.msra.mxu0 %v1538
    %1568 = vmatpush.bf16.msra.mxu0 %v1536
    %1569 = vmatpush.bf16.msra.mxu0 %v1534
    %1570 = vmatpush.bf16.msra.mxu0 %v1532
    %1571 = vmatpush.bf16.msra.mxu0 %v1530
    %1572 = vmatmul.bf16.gmra.mxu0 %v1553
    %v1573 = vpop.f32.mrf.mxu0
    %v1574 = vadd.f32 0.0, %v1573
    %v1575 = vpop.f32.mrf.mxu0
    %v1576 = vadd.f32 0.0, %v1575
    %1577 = vmatmul.bf16.gmra.mxu0 %v1556
    %v1578 = vpop.f32.mrf.mxu0
    %v1579 = vadd.f32 0.0, %v1578
    %v1580 = vpop.f32.mrf.mxu0
    %v1581 = vadd.f32 0.0, %v1580
    %1582 = vdwg.mxu0
    %1583 = vmatpush.bf16.msra.mxu0 0
    %1584 = vmatpush.bf16.msra.mxu0 0
    %1585 = vmatpush.bf16.msra.mxu0 %v1562
    %1586 = vmatpush.bf16.msra.mxu0 %v1539
    %1587 = vmatpush.bf16.msra.mxu0 %v1537
    %1588 = vmatpush.bf16.msra.mxu0 %v1535
    %1589 = vmatpush.bf16.msra.mxu0 %v1533
    %1590 = vmatpush.bf16.msra.mxu0 %v1531
    %1591 = vmatmul.bf16.gmra.mxu0 %v1553
    %v1592 = vpop.f32.mrf.mxu0
    %v1593 = vadd.f32 0.0, %v1592
    %v1594 = vpop.f32.mrf.mxu0
    %v1595 = vadd.f32 0.0, %v1594
    %1596 = vmatmul.bf16.gmra.mxu0 %v1556
    %v1597 = vpop.f32.mrf.mxu0
    %v1598 = vadd.f32 0.0, %v1597
    %v1599 = vpop.f32.mrf.mxu0
    %v1600 = vadd.f32 0.0, %v1599
    %1601 = vdwg.mxu0
    %v1602 = vadd.f32 %v1455, %v1574
    %v1603 = vadd.f32 %v1456, %v1593
    %v1604 = vadd.f32 %v1457, %v1576
    %v1605 = vadd.f32 %v1458, %v1595
    %v1606 = vadd.f32 %v1459, %v1579
    %v1607 = vadd.f32 %v1460, %v1598
    %v1608 = vadd.f32 %v1461, %v1581
    %v1609 = vadd.f32 %v1462, %v1600
    %s1610 = scalar_lea.vmem [#allocation3], 8
    %v1611 = vld [vmem:[%s1610] ss:$2 sm:$0xff]
    %s1612 = scalar_lea.vmem [#allocation3], 24
    %v1613 = vld [vmem:[%s1612] ss:$2 sm:$0xff]
    %s1614 = scalar_lea.vmem [#allocation3], 40
    %v1615 = vld [vmem:[%s1614] ss:$2 sm:$0xff]
    %s1616 = scalar_lea.vmem [#allocation3], 56
    %v1617 = vld [vmem:[%s1616] ss:$2 sm:$0xff]
    %s1618 = scalar_lea.vmem [#allocation3], 9
    %v1619 = vld [vmem:[%s1618] ss:$2 sm:$0xff]
    %s1620 = scalar_lea.vmem [#allocation3], 25
    %v1621 = vld [vmem:[%s1620] ss:$2 sm:$0xff]
    %s1622 = scalar_lea.vmem [#allocation3], 41
    %v1623 = vld [vmem:[%s1622] ss:$2 sm:$0xff]
    %s1624 = scalar_lea.vmem [#allocation3], 57
    %v1625 = vld [vmem:[%s1624] ss:$2 sm:$0xff]
    %v1626 = vmax.f32 %v1611, %v1619
    %v1627 = vmax.f32 %v1613, %v1621
    %v1628 = vmax.f32 %v1615, %v1623
    %v1629 = vmax.f32 %v1617, %v1625
    %v1630 = vpack.c.bf16 %v1627, %v1626
    %v1631 = vpack.c.bf16 %v1629, %v1628
    %s1632 = scalar_lea.vmem %s4, 352
    %v1633 = vld [vmem:[%s1632] sm:$0xff]
    %v1634 = vld [vmem:[%s1632 + $0x8] sm:$0xff]
    %v1635 = vld [vmem:[%s1632 + $0x10] sm:$0xff]
    %v1636 = vld [vmem:[%s1632 + $0x18] sm:$0xff]
    %v1637 = vld [vmem:[%s1632 + $0x20] sm:$0xff]
    %v1638 = vld [vmem:[%s1632 + $0x28] sm:$0xff]
    %v1639 = vld [vmem:[%s1632 + $0x30] sm:$0xff]
    %v1640 = vld [vmem:[%s1632 + $0x38] sm:$0xff]
    %v1641 = vld [vmem:[%s1632 + $0x40] sm:$0xff]
    %v1642 = vld [vmem:[%s1632 + $0x48] sm:$0xff]
    %v1643 = vld [vmem:[%s1632 + $0x50] sm:$0x33]
    %v1655 = vunpack.c.l.b16 %v1633
    %v1656 = vunpack.c.h.b16 %v1633
    %v1657 = vunpack.c.l.b16 %v1634
    %v1658 = vunpack.c.h.b16 %v1634
    %v1659 = vunpack.c.l.b16 %v1635
    %v1660 = vunpack.c.h.b16 %v1635
    %v1661 = vunpack.c.l.b16 %v1636
    %v1662 = vunpack.c.h.b16 %v1636
    %v1663 = vunpack.c.l.b16 %v1637
    %v1664 = vunpack.c.h.b16 %v1637
    %v1665 = vunpack.c.l.b16 %v1638
    %v1666 = vunpack.c.h.b16 %v1638
    %v1667 = vunpack.c.l.b16 %v1639
    %v1668 = vunpack.c.h.b16 %v1639
    %v1669 = vunpack.c.l.b16 %v1640
    %v1670 = vunpack.c.h.b16 %v1640
    %v1671 = vunpack.c.l.b16 %v1641
    %v1672 = vunpack.c.h.b16 %v1641
    %v1673 = vunpack.c.l.b16 %v1642
    %v1674 = vunpack.c.h.b16 %v1642
    %v1675 = vunpack.c.l.b16 %v1643
    %v1676 = vunpack.c.h.b16 %v1643
    %v1677 = vpack.c.b16 %v1657, %v1655
    %v1678 = vpack.c.b16 %v1658, %v1656
    %v1679 = vpack.c.b16 %v1661, %v1659
    %v1680 = vpack.c.b16 %v1662, %v1660
    %v1681 = vpack.c.b16 %v1665, %v1663
    %v1682 = vpack.c.b16 %v1666, %v1664
    %v1683 = vpack.c.b16 %v1669, %v1667
    %v1684 = vpack.c.b16 %v1670, %v1668
    %v1685 = vpack.c.b16 %v1673, %v1671
    %v1686 = vpack.c.b16 %v1674, %v1672
    %v1687 = vpack.c.b16 %v1675, %v1675
    %v1688 = vpack.c.b16 %v1676, %v1676
    %v1700 = vsel %vm64, %v1630, 0
    %v1703 = vsel %vm64, %v1631, 0
    %v1706 = vsel %vm1166, %v1687, 0
    %v1709 = vsel %vm1166, %v1688, 0
    %1711 = vmatpush.bf16.msra.mxu0 0
    %1712 = vmatpush.bf16.msra.mxu0 0
    %1713 = vmatpush.bf16.msra.mxu0 %v1706
    %1714 = vmatpush.bf16.msra.mxu0 %v1685
    %1715 = vmatpush.bf16.msra.mxu0 %v1683
    %1716 = vmatpush.bf16.msra.mxu0 %v1681
    %1717 = vmatpush.bf16.msra.mxu0 %v1679
    %1718 = vmatpush.bf16.msra.mxu0 %v1677
    %1719 = vmatmul.bf16.gmra.mxu0 %v1700
    %v1720 = vpop.f32.mrf.mxu0
    %v1721 = vadd.f32 0.0, %v1720
    %v1722 = vpop.f32.mrf.mxu0
    %v1723 = vadd.f32 0.0, %v1722
    %1724 = vmatmul.bf16.gmra.mxu0 %v1703
    %v1725 = vpop.f32.mrf.mxu0
    %v1726 = vadd.f32 0.0, %v1725
    %v1727 = vpop.f32.mrf.mxu0
    %v1728 = vadd.f32 0.0, %v1727
    %1729 = vdwg.mxu0
    %1730 = vmatpush.bf16.msra.mxu0 0
    %1731 = vmatpush.bf16.msra.mxu0 0
    %1732 = vmatpush.bf16.msra.mxu0 %v1709
    %1733 = vmatpush.bf16.msra.mxu0 %v1686
    %1734 = vmatpush.bf16.msra.mxu0 %v1684
    %1735 = vmatpush.bf16.msra.mxu0 %v1682
    %1736 = vmatpush.bf16.msra.mxu0 %v1680
    %1737 = vmatpush.bf16.msra.mxu0 %v1678
    %1738 = vmatmul.bf16.gmra.mxu0 %v1700
    %v1739 = vpop.f32.mrf.mxu0
    %v1740 = vadd.f32 0.0, %v1739
    %v1741 = vpop.f32.mrf.mxu0
    %v1742 = vadd.f32 0.0, %v1741
    %1743 = vmatmul.bf16.gmra.mxu0 %v1703
    %v1744 = vpop.f32.mrf.mxu0
    %v1745 = vadd.f32 0.0, %v1744
    %v1746 = vpop.f32.mrf.mxu0
    %v1747 = vadd.f32 0.0, %v1746
    %1748 = vdwg.mxu0
    %v1749 = vadd.f32 %v1602, %v1721
    %v1750 = vadd.f32 %v1603, %v1740
    %v1751 = vadd.f32 %v1604, %v1723
    %v1752 = vadd.f32 %v1605, %v1742
    %v1753 = vadd.f32 %v1606, %v1726
    %v1754 = vadd.f32 %v1607, %v1745
    %v1755 = vadd.f32 %v1608, %v1728
    %v1756 = vadd.f32 %v1609, %v1747
    %v1757 = vpack.c.bf16 %v1751, %v1749
    %v1758 = vpack.c.bf16 %v1752, %v1750
    %v1759 = vpack.c.bf16 %v1755, %v1753
    %v1760 = vpack.c.bf16 %v1756, %v1754
    %v1781 = vunpack.c.l.b16 %v111
    %v1782 = vunpack.c.l.b16 %v112
    %v1783 = vunpack.c.l.b16 %v113
    %v1784 = vunpack.c.l.b16 %v114
    %v1785 = vunpack.c.l.b16 %v115
    %v1786 = vunpack.c.l.b16 %v116
    %v1787 = vunpack.c.l.b16 %v117
    %v1788 = vunpack.c.l.b16 %v118
    %v1789 = vunpack.c.l.b16 %v119
    %v1790 = vunpack.c.l.b16 %v120
    %v1791 = vunpack.c.l.b16 %v121
    %v1792 = vunpack.c.l.b16 %v122
    %v1793 = vunpack.c.l.b16 %v123
    %v1794 = vunpack.c.l.b16 %v124
    %v1795 = vunpack.c.l.b16 %v125
    %v1796 = vunpack.c.l.b16 %v126
    %v1797 = vunpack.c.l.b16 %v127
    %v1798 = vunpack.c.l.b16 %v128
    %v1799 = vunpack.c.l.b16 %v129
    %v1800 = vunpack.c.l.b16 %v130
    %v1801 = vpack.c.b16 %v1782, %v1781
    %v1802 = vpack.c.b16 %v1784, %v1783
    %v1803 = vpack.c.b16 %v1786, %v1785
    %v1804 = vpack.c.b16 %v1788, %v1787
    %v1805 = vpack.c.b16 %v1790, %v1789
    %v1806 = vpack.c.b16 %v1792, %v1791
    %v1807 = vpack.c.b16 %v1794, %v1793
    %v1808 = vpack.c.b16 %v1796, %v1795
    %v1809 = vpack.c.b16 %v1798, %v1797
    %v1810 = vpack.c.b16 %v1800, %v1799
    %v1822 = vsel %vm54, %v1758, 0
    %v1825 = vsel %vm54, %v1760, 0
    %1827 = vmatpush.bf16.msra.mxu0 %v1808
    %1828 = vmatpush.bf16.msra.mxu0 %v1807
    %1829 = vmatpush.bf16.msra.mxu0 %v1806
    %1830 = vmatpush.bf16.msra.mxu0 %v1805
    %1831 = vmatpush.bf16.msra.mxu0 %v1804
    %1832 = vmatpush.bf16.msra.mxu0 %v1803
    %1833 = vmatpush.bf16.msra.mxu0 %v1802
    %1834 = vmatpush.bf16.msra.mxu0 %v1801
    %1835 = vmatmul.bf16.gmra.mxu0 %v1757
    %v1836 = vpop.f32.mrf.mxu0
    %v1837 = vadd.f32 0.0, %v1836
    %v1838 = vpop.f32.mrf.mxu0
    %v1839 = vadd.f32 0.0, %v1838
    %1840 = vmatmul.bf16.gmra.mxu0 %v1759
    %v1841 = vpop.f32.mrf.mxu0
    %v1842 = vadd.f32 0.0, %v1841
    %v1843 = vpop.f32.mrf.mxu0
    %v1844 = vadd.f32 0.0, %v1843
    %1845 = vdwg.mxu0
    %1846 = vmatpush.bf16.msra.mxu0 0
    %1847 = vmatpush.bf16.msra.mxu0 0
    %1848 = vmatpush.bf16.msra.mxu0 0
    %1849 = vmatpush.bf16.msra.mxu0 0
    %1850 = vmatpush.bf16.msra.mxu0 0
    %1851 = vmatpush.bf16.msra.mxu0 0
    %1852 = vmatpush.bf16.msra.mxu0 %v1810
    %1853 = vmatpush.bf16.msra.mxu0 %v1809
    %1854 = vmatmul.bf16.gmra.mxu0 %v1822
    %v1855 = vpop.f32.mrf.mxu0
    %v1856 = vadd.f32 %v1837, %v1855
    %v1857 = vpop.f32.mrf.mxu0
    %v1858 = vadd.f32 %v1839, %v1857
    %1859 = vmatmul.bf16.gmra.mxu0 %v1825
    %v1860 = vpop.f32.mrf.mxu0
    %v1861 = vadd.f32 %v1842, %v1860
    %v1862 = vpop.f32.mrf.mxu0
    %v1863 = vadd.f32 %v1844, %v1862
    %1864 = vdwg.mxu0
    %v1885 = vunpack.c.l.b16 %v132
    %v1886 = vunpack.c.l.b16 %v133
    %v1887 = vunpack.c.l.b16 %v134
    %v1888 = vunpack.c.l.b16 %v135
    %v1889 = vunpack.c.l.b16 %v136
    %v1890 = vunpack.c.l.b16 %v137
    %v1891 = vunpack.c.l.b16 %v138
    %v1892 = vunpack.c.l.b16 %v139
    %v1893 = vunpack.c.l.b16 %v140
    %v1894 = vunpack.c.l.b16 %v141
    %v1895 = vunpack.c.l.b16 %v142
    %v1896 = vunpack.c.l.b16 %v143
    %v1897 = vunpack.c.l.b16 %v144
    %v1898 = vunpack.c.l.b16 %v145
    %v1899 = vunpack.c.l.b16 %v146
    %v1900 = vunpack.c.l.b16 %v147
    %v1901 = vunpack.c.l.b16 %v148
    %v1902 = vunpack.c.l.b16 %v149
    %v1903 = vunpack.c.l.b16 %v150
    %v1904 = vunpack.c.l.b16 %v151
    %v1905 = vpack.c.b16 %v1886, %v1885
    %v1906 = vpack.c.b16 %v1888, %v1887
    %v1907 = vpack.c.b16 %v1890, %v1889
    %v1908 = vpack.c.b16 %v1892, %v1891
    %v1909 = vpack.c.b16 %v1894, %v1893
    %v1910 = vpack.c.b16 %v1896, %v1895
    %v1911 = vpack.c.b16 %v1898, %v1897
    %v1912 = vpack.c.b16 %v1900, %v1899
    %v1913 = vpack.c.b16 %v1902, %v1901
    %v1914 = vpack.c.b16 %v1904, %v1903
    %1925 = vmatpush.bf16.msra.mxu0 %v1912
    %1926 = vmatpush.bf16.msra.mxu0 %v1911
    %1927 = vmatpush.bf16.msra.mxu0 %v1910
    %1928 = vmatpush.bf16.msra.mxu0 %v1909
    %1929 = vmatpush.bf16.msra.mxu0 %v1908
    %1930 = vmatpush.bf16.msra.mxu0 %v1907
    %1931 = vmatpush.bf16.msra.mxu0 %v1906
    %1932 = vmatpush.bf16.msra.mxu0 %v1905
    %1933 = vmatmul.bf16.gmra.mxu0 %v1757
    %v1934 = vpop.f32.mrf.mxu0
    %v1935 = vadd.f32 0.0, %v1934
    %v1936 = vpop.f32.mrf.mxu0
    %v1937 = vadd.f32 0.0, %v1936
    %1938 = vmatmul.bf16.gmra.mxu0 %v1759
    %v1939 = vpop.f32.mrf.mxu0
    %v1940 = vadd.f32 0.0, %v1939
    %v1941 = vpop.f32.mrf.mxu0
    %v1942 = vadd.f32 0.0, %v1941
    %1943 = vdwg.mxu0
    %1944 = vmatpush.bf16.msra.mxu0 0
    %1945 = vmatpush.bf16.msra.mxu0 0
    %1946 = vmatpush.bf16.msra.mxu0 0
    %1947 = vmatpush.bf16.msra.mxu0 0
    %1948 = vmatpush.bf16.msra.mxu0 0
    %1949 = vmatpush.bf16.msra.mxu0 0
    %1950 = vmatpush.bf16.msra.mxu0 %v1914
    %1951 = vmatpush.bf16.msra.mxu0 %v1913
    %1952 = vmatmul.bf16.gmra.mxu0 %v1822
    %v1953 = vpop.f32.mrf.mxu0
    %v1954 = vadd.f32 %v1935, %v1953
    %v1955 = vpop.f32.mrf.mxu0
    %v1956 = vadd.f32 %v1937, %v1955
    %1957 = vmatmul.bf16.gmra.mxu0 %v1825
    %v1958 = vpop.f32.mrf.mxu0
    %v1959 = vadd.f32 %v1940, %v1958
    %v1960 = vpop.f32.mrf.mxu0
    %v1961 = vadd.f32 %v1942, %v1960
    %1962 = vdwg.mxu0
    %v1963 = vmax.f32 %v1856, %v1954
    %v1964 = vmax.f32 %v1858, %v1956
    %v1965 = vmax.f32 %v1861, %v1959
    %v1966 = vmax.f32 %v1863, %v1961
    %v1968 = vperm.slane %v67, 0
    %v1970 = vadd.f32 %v1963, %v1968
    %v1971 = vadd.f32 %v1964, %v1968
    %v1972 = vadd.f32 %v1965, %v1968
    %v1973 = vadd.f32 %v1966, %v1968
    %v1974 = vmax.f32 %v1970, 0.0
    %v1975 = vmax.f32 %v1971, 0.0
    %v1976 = vmax.f32 %v1972, 0.0
    %v1977 = vmax.f32 %v1973, 0.0
    %vm1978 = vcmask 654336
    %1979 = vst.msk [vmem:[#allocation4] sm:$0xff] %vm1978, %v1974
    %1980 = vst.msk [vmem:[#allocation4 + $0x8] sm:$0xff] %vm1978, %v1975
    %1981 = vst.msk [vmem:[#allocation4 + $0x10] sm:$0xff] %vm1978, %v1976
    %1982 = vst.msk [vmem:[#allocation4 + $0x18] sm:$0xff] %vm1978, %v1977
    %v1983 = vld [vmem:[#allocation4] ss:$16 sm:$0x3]
    %s1984 = scalar_lea.vmem [#allocation4], 1
    %v1985 = vld [vmem:[%s1984] ss:$16 sm:$0x3]
    %v1986 = vmax.f32 %v1983, %v1985
    %v1987 = vpack.c.bf16 %v1986, %v1986
    %v1988 = vld [vmem:[%s7] sm:$0xf]
    %v1989 = vld [vmem:[%s7 + $0x4] sm:$0xf]
    %v1990 = vld [vmem:[%s7 + $0x8] sm:$0xf]
    %v1991 = vld [vmem:[%s7 + $0xc] sm:$0xf]
    %v1992 = vld [vmem:[%s7 + $0x10] sm:$0xf]
    %v1993 = vld [vmem:[%s7 + $0x14] sm:$0xf]
    %v1994 = vld [vmem:[%s7 + $0x18] sm:$0xf]
    %v1995 = vld [vmem:[%s7 + $0x1c] sm:$0xf]
    %v1996 = vld [vmem:[%s7 + $0x20] sm:$0xf]
    %v1997 = vld [vmem:[%s7 + $0x24] sm:$0xf]
    %s1998 = scalar_lea.vmem [#allocation4], 2
    %v1999 = vld [vmem:[%s1998] ss:$16 sm:$0x3]
    %s2000 = scalar_lea.vmem [#allocation4], 3
    %v2001 = vld [vmem:[%s2000] ss:$16 sm:$0x3]
    %v2002 = vmax.f32 %v1999, %v2001
    %v2003 = vpack.c.bf16 %v2002, %v2002
    %s2004 = scalar_lea.vmem %s7, 40
    %v2005 = vld [vmem:[%s2004] sm:$0xf]
    %v2006 = vld [vmem:[%s2004 + $0x4] sm:$0xf]
    %v2007 = vld [vmem:[%s2004 + $0x8] sm:$0xf]
    %v2008 = vld [vmem:[%s2004 + $0xc] sm:$0xf]
    %v2009 = vld [vmem:[%s2004 + $0x10] sm:$0xf]
    %v2010 = vld [vmem:[%s2004 + $0x14] sm:$0xf]
    %v2011 = vld [vmem:[%s2004 + $0x18] sm:$0xf]
    %v2012 = vld [vmem:[%s2004 + $0x1c] sm:$0xf]
    %v2013 = vld [vmem:[%s2004 + $0x20] sm:$0xf]
    %v2014 = vld [vmem:[%s2004 + $0x24] sm:$0xf]
    %v2025 = vunpack.c.l.b16 %v2005
    %v2026 = vunpack.c.l.b16 %v2006
    %v2027 = vunpack.c.l.b16 %v2007
    %v2028 = vunpack.c.l.b16 %v2008
    %v2029 = vunpack.c.l.b16 %v2009
    %v2030 = vunpack.c.l.b16 %v2010
    %v2031 = vunpack.c.l.b16 %v2011
    %v2032 = vunpack.c.l.b16 %v2012
    %v2033 = vunpack.c.l.b16 %v2013
    %v2034 = vunpack.c.l.b16 %v2014
    %v2035 = vpack.c.b16 %v2026, %v2025
    %v2036 = vpack.c.b16 %v2028, %v2027
    %v2037 = vpack.c.b16 %v2030, %v2029
    %v2038 = vpack.c.b16 %v2032, %v2031
    %v2039 = vpack.c.b16 %v2034, %v2033
    %v2046 = vsel %vm1978, %v2003, 0
    %2048 = vmatpush.bf16.msra.mxu0 0
    %2049 = vmatpush.bf16.msra.mxu0 0
    %2050 = vmatpush.bf16.msra.mxu0 0
    %2051 = vmatpush.bf16.msra.mxu0 %v2039
    %2052 = vmatpush.bf16.msra.mxu0 %v2038
    %2053 = vmatpush.bf16.msra.mxu0 %v2037
    %2054 = vmatpush.bf16.msra.mxu0 %v2036
    %2055 = vmatpush.bf16.msra.mxu0 %v2035
    %2056 = vmatmul.bf16.gmra.mxu0 %v2046
    %v2057 = vpop.f32.mrf.mxu0
    %v2058 = vadd.f32 0.0, %v2057
    %v2059 = vpop.f32.mrf.mxu0
    %2060 = vdwg.mxu0
    %v2071 = vunpack.c.l.b16 %v1988
    %v2072 = vunpack.c.l.b16 %v1989
    %v2073 = vunpack.c.l.b16 %v1990
    %v2074 = vunpack.c.l.b16 %v1991
    %v2075 = vunpack.c.l.b16 %v1992
    %v2076 = vunpack.c.l.b16 %v1993
    %v2077 = vunpack.c.l.b16 %v1994
    %v2078 = vunpack.c.l.b16 %v1995
    %v2079 = vunpack.c.l.b16 %v1996
    %v2080 = vunpack.c.l.b16 %v1997
    %v2081 = vpack.c.b16 %v2072, %v2071
    %v2082 = vpack.c.b16 %v2074, %v2073
    %v2083 = vpack.c.b16 %v2076, %v2075
    %v2084 = vpack.c.b16 %v2078, %v2077
    %v2085 = vpack.c.b16 %v2080, %v2079
    %v2092 = vsel %vm1978, %v1987, 0
    %2094 = vmatpush.bf16.msra.mxu0 0
    %2095 = vmatpush.bf16.msra.mxu0 0
    %2096 = vmatpush.bf16.msra.mxu0 0
    %2097 = vmatpush.bf16.msra.mxu0 %v2085
    %2098 = vmatpush.bf16.msra.mxu0 %v2084
    %2099 = vmatpush.bf16.msra.mxu0 %v2083
    %2100 = vmatpush.bf16.msra.mxu0 %v2082
    %2101 = vmatpush.bf16.msra.mxu0 %v2081
    %2102 = vmatmul.bf16.gmra.mxu0 %v2092
    %v2103 = vpop.f32.mrf.mxu0
    %v2104 = vadd.f32 %v2058, %v2103
    %v2105 = vpop.f32.mrf.mxu0
    %2106 = vdwg.mxu0
    %s2107 = scalar_lea.vmem [#allocation4], 4
    %v2108 = vld [vmem:[%s2107] ss:$16 sm:$0x3]
    %s2109 = scalar_lea.vmem [#allocation4], 5
    %v2110 = vld [vmem:[%s2109] ss:$16 sm:$0x3]
    %v2111 = vmax.f32 %v2108, %v2110
    %v2112 = vpack.c.bf16 %v2111, %v2111
    %s2113 = scalar_lea.vmem %s7, 80
    %v2114 = vld [vmem:[%s2113] sm:$0xf]
    %v2115 = vld [vmem:[%s2113 + $0x4] sm:$0xf]
    %v2116 = vld [vmem:[%s2113 + $0x8] sm:$0xf]
    %v2117 = vld [vmem:[%s2113 + $0xc] sm:$0xf]
    %v2118 = vld [vmem:[%s2113 + $0x10] sm:$0xf]
    %v2119 = vld [vmem:[%s2113 + $0x14] sm:$0xf]
    %v2120 = vld [vmem:[%s2113 + $0x18] sm:$0xf]
    %v2121 = vld [vmem:[%s2113 + $0x1c] sm:$0xf]
    %v2122 = vld [vmem:[%s2113 + $0x20] sm:$0xf]
    %v2123 = vld [vmem:[%s2113 + $0x24] sm:$0xf]
    %v2134 = vunpack.c.l.b16 %v2114
    %v2135 = vunpack.c.l.b16 %v2115
    %v2136 = vunpack.c.l.b16 %v2116
    %v2137 = vunpack.c.l.b16 %v2117
    %v2138 = vunpack.c.l.b16 %v2118
    %v2139 = vunpack.c.l.b16 %v2119
    %v2140 = vunpack.c.l.b16 %v2120
    %v2141 = vunpack.c.l.b16 %v2121
    %v2142 = vunpack.c.l.b16 %v2122
    %v2143 = vunpack.c.l.b16 %v2123
    %v2144 = vpack.c.b16 %v2135, %v2134
    %v2145 = vpack.c.b16 %v2137, %v2136
    %v2146 = vpack.c.b16 %v2139, %v2138
    %v2147 = vpack.c.b16 %v2141, %v2140
    %v2148 = vpack.c.b16 %v2143, %v2142
    %v2155 = vsel %vm1978, %v2112, 0
    %2157 = vmatpush.bf16.msra.mxu0 0
    %2158 = vmatpush.bf16.msra.mxu0 0
    %2159 = vmatpush.bf16.msra.mxu0 0
    %2160 = vmatpush.bf16.msra.mxu0 %v2148
    %2161 = vmatpush.bf16.msra.mxu0 %v2147
    %2162 = vmatpush.bf16.msra.mxu0 %v2146
    %2163 = vmatpush.bf16.msra.mxu0 %v2145
    %2164 = vmatpush.bf16.msra.mxu0 %v2144
    %2165 = vmatmul.bf16.gmra.mxu0 %v2155
    %v2166 = vpop.f32.mrf.mxu0
    %v2167 = vadd.f32 0.0, %v2166
    %v2168 = vpop.f32.mrf.mxu0
    %2169 = vdwg.mxu0
    %v2170 = vadd.f32 %v2104, %v2167
    %s2171 = scalar_lea.vmem [#allocation4], 6
    %v2172 = vld [vmem:[%s2171] ss:$16 sm:$0x3]
    %s2173 = scalar_lea.vmem [#allocation4], 7
    %v2174 = vld [vmem:[%s2173] ss:$16 sm:$0x3]
    %v2175 = vmax.f32 %v2172, %v2174
    %v2176 = vpack.c.bf16 %v2175, %v2175
    %s2177 = scalar_lea.vmem %s7, 120
    %v2178 = vld [vmem:[%s2177] sm:$0xf]
    %v2179 = vld [vmem:[%s2177 + $0x4] sm:$0xf]
    %v2180 = vld [vmem:[%s2177 + $0x8] sm:$0xf]
    %v2181 = vld [vmem:[%s2177 + $0xc] sm:$0xf]
    %v2182 = vld [vmem:[%s2177 + $0x10] sm:$0xf]
    %v2183 = vld [vmem:[%s2177 + $0x14] sm:$0xf]
    %v2184 = vld [vmem:[%s2177 + $0x18] sm:$0xf]
    %v2185 = vld [vmem:[%s2177 + $0x1c] sm:$0xf]
    %v2186 = vld [vmem:[%s2177 + $0x20] sm:$0xf]
    %v2187 = vld [vmem:[%s2177 + $0x24] sm:$0xf]
    %v2198 = vunpack.c.l.b16 %v2178
    %v2199 = vunpack.c.l.b16 %v2179
    %v2200 = vunpack.c.l.b16 %v2180
    %v2201 = vunpack.c.l.b16 %v2181
    %v2202 = vunpack.c.l.b16 %v2182
    %v2203 = vunpack.c.l.b16 %v2183
    %v2204 = vunpack.c.l.b16 %v2184
    %v2205 = vunpack.c.l.b16 %v2185
    %v2206 = vunpack.c.l.b16 %v2186
    %v2207 = vunpack.c.l.b16 %v2187
    %v2208 = vpack.c.b16 %v2199, %v2198
    %v2209 = vpack.c.b16 %v2201, %v2200
    %v2210 = vpack.c.b16 %v2203, %v2202
    %v2211 = vpack.c.b16 %v2205, %v2204
    %v2212 = vpack.c.b16 %v2207, %v2206
    %v2219 = vsel %vm1978, %v2176, 0
    %2221 = vmatpush.bf16.msra.mxu0 0
    %2222 = vmatpush.bf16.msra.mxu0 0
    %2223 = vmatpush.bf16.msra.mxu0 0
    %2224 = vmatpush.bf16.msra.mxu0 %v2212
    %2225 = vmatpush.bf16.msra.mxu0 %v2211
    %2226 = vmatpush.bf16.msra.mxu0 %v2210
    %2227 = vmatpush.bf16.msra.mxu0 %v2209
    %2228 = vmatpush.bf16.msra.mxu0 %v2208
    %2229 = vmatmul.bf16.gmra.mxu0 %v2219
    %v2230 = vpop.f32.mrf.mxu0
    %v2231 = vadd.f32 0.0, %v2230
    %v2232 = vpop.f32.mrf.mxu0
    %2233 = vdwg.mxu0
    %v2234 = vadd.f32 %v2170, %v2231
    %s2235 = scalar_lea.vmem [#allocation4], 8
    %v2236 = vld [vmem:[%s2235] ss:$16 sm:$0x3]
    %s2237 = scalar_lea.vmem [#allocation4], 9
    %v2238 = vld [vmem:[%s2237] ss:$16 sm:$0x3]
    %v2239 = vmax.f32 %v2236, %v2238
    %v2240 = vpack.c.bf16 %v2239, %v2239
    %s2241 = scalar_lea.vmem %s7, 160
    %v2242 = vld [vmem:[%s2241] sm:$0xf]
    %v2243 = vld [vmem:[%s2241 + $0x4] sm:$0xf]
    %v2244 = vld [vmem:[%s2241 + $0x8] sm:$0xf]
    %v2245 = vld [vmem:[%s2241 + $0xc] sm:$0xf]
    %v2246 = vld [vmem:[%s2241 + $0x10] sm:$0xf]
    %v2247 = vld [vmem:[%s2241 + $0x14] sm:$0xf]
    %v2248 = vld [vmem:[%s2241 + $0x18] sm:$0xf]
    %v2249 = vld [vmem:[%s2241 + $0x1c] sm:$0xf]
    %v2250 = vld [vmem:[%s2241 + $0x20] sm:$0xf]
    %v2251 = vld [vmem:[%s2241 + $0x24] sm:$0xf]
    %v2262 = vunpack.c.l.b16 %v2242
    %v2263 = vunpack.c.l.b16 %v2243
    %v2264 = vunpack.c.l.b16 %v2244
    %v2265 = vunpack.c.l.b16 %v2245
    %v2266 = vunpack.c.l.b16 %v2246
    %v2267 = vunpack.c.l.b16 %v2247
    %v2268 = vunpack.c.l.b16 %v2248
    %v2269 = vunpack.c.l.b16 %v2249
    %v2270 = vunpack.c.l.b16 %v2250
    %v2271 = vunpack.c.l.b16 %v2251
    %v2272 = vpack.c.b16 %v2263, %v2262
    %v2273 = vpack.c.b16 %v2265, %v2264
    %v2274 = vpack.c.b16 %v2267, %v2266
    %v2275 = vpack.c.b16 %v2269, %v2268
    %v2276 = vpack.c.b16 %v2271, %v2270
    %v2283 = vsel %vm1978, %v2240, 0
    %2285 = vmatpush.bf16.msra.mxu0 0
    %2286 = vmatpush.bf16.msra.mxu0 0
    %2287 = vmatpush.bf16.msra.mxu0 0
    %2288 = vmatpush.bf16.msra.mxu0 %v2276
    %2289 = vmatpush.bf16.msra.mxu0 %v2275
    %2290 = vmatpush.bf16.msra.mxu0 %v2274
    %2291 = vmatpush.bf16.msra.mxu0 %v2273
    %2292 = vmatpush.bf16.msra.mxu0 %v2272
    %2293 = vmatmul.bf16.gmra.mxu0 %v2283
    %v2294 = vpop.f32.mrf.mxu0
    %v2295 = vadd.f32 0.0, %v2294
    %v2296 = vpop.f32.mrf.mxu0
    %2297 = vdwg.mxu0
    %v2298 = vadd.f32 %v2234, %v2295
    %v2299 = vld [vmem:[%s8] sm:$0x1]
    %v2301 = vperm.slane %v2299, 0
    %v2303 = vadd.f32 %v2298, %v2301
    %v2304 = vmax.f32 %v2303, 0.0
    %v2305 = vpack.c.bf16 %v2304, %v2304
    %v2306 = vld [vmem:[%s9] sm:$0xf]
    %v2307 = vld [vmem:[%s9 + $0x4] sm:$0xf]
    %v2308 = vld [vmem:[%s9 + $0x8] sm:$0xf]
    %v2309 = vld [vmem:[%s9 + $0xc] sm:$0xf]
    %v2310 = vld [vmem:[%s9 + $0x10] sm:$0xf]
    %v2311 = vld [vmem:[%s9 + $0x14] sm:$0xf]
    %v2312 = vld [vmem:[%s9 + $0x18] sm:$0xf]
    %v2313 = vld [vmem:[%s9 + $0x1c] sm:$0xf]
    %v2314 = vld [vmem:[%s9 + $0x20] sm:$0xf]
    %v2315 = vld [vmem:[%s9 + $0x24] sm:$0xf]
    %v2316 = vld [vmem:[%s9 + $0x28] sm:$0xf]
    %v2317 = vld [vmem:[%s9 + $0x2c] sm:$0xf]
    %v2318 = vld [vmem:[%s9 + $0x30] sm:$0xf]
    %v2319 = vld [vmem:[%s9 + $0x34] sm:$0xf]
    %v2320 = vld [vmem:[%s9 + $0x38] sm:$0xf]
    %v2321 = vld [vmem:[%s9 + $0x3c] sm:$0xf]
    %v2322 = vld [vmem:[%s10] sm:$0x1]
    %v2324 = vperm.slane %v2322, 0
    %v2342 = vunpack.c.l.b16 %v2306
    %v2343 = vunpack.c.l.b16 %v2307
    %v2344 = vunpack.c.l.b16 %v2308
    %v2345 = vunpack.c.l.b16 %v2309
    %v2346 = vunpack.c.l.b16 %v2310
    %v2347 = vunpack.c.l.b16 %v2311
    %v2348 = vunpack.c.l.b16 %v2312
    %v2349 = vunpack.c.l.b16 %v2313
    %v2350 = vunpack.c.l.b16 %v2314
    %v2351 = vunpack.c.l.b16 %v2315
    %v2352 = vunpack.c.l.b16 %v2316
    %v2353 = vunpack.c.l.b16 %v2317
    %v2354 = vunpack.c.l.b16 %v2318
    %v2355 = vunpack.c.l.b16 %v2319
    %v2356 = vunpack.c.l.b16 %v2320
    %v2357 = vunpack.c.l.b16 %v2321
    %v2358 = vpack.c.b16 %v2343, %v2342
    %v2359 = vpack.c.b16 %v2345, %v2344
    %v2360 = vpack.c.b16 %v2347, %v2346
    %v2361 = vpack.c.b16 %v2349, %v2348
    %v2362 = vpack.c.b16 %v2351, %v2350
    %v2363 = vpack.c.b16 %v2353, %v2352
    %v2364 = vpack.c.b16 %v2355, %v2354
    %v2365 = vpack.c.b16 %v2357, %v2356
    %2374 = vmatpush.bf16.msra.mxu0 %v2365
    %2375 = vmatpush.bf16.msra.mxu0 %v2364
    %2376 = vmatpush.bf16.msra.mxu0 %v2363
    %2377 = vmatpush.bf16.msra.mxu0 %v2362
    %2378 = vmatpush.bf16.msra.mxu0 %v2361
    %2379 = vmatpush.bf16.msra.mxu0 %v2360
    %2380 = vmatpush.bf16.msra.mxu0 %v2359
    %2381 = vmatpush.bf16.msra.mxu0 %v2358
    %2382 = vmatmul.bf16.gmra.mxu0 %v2305
    %v2383 = vpop.f32.mrf.mxu0
    %v2384 = vadd.f32 %v2324, %v2383
    %v2385 = vpop.f32.mrf.mxu0
    %2386 = vdwg.mxu0
    %v2387 = vmax.f32 %v2384, 0.0
    %v2388 = vpack.c.bf16 %v2387, %v2387
    %v2389 = vld [vmem:[%s11] sm:$0xf]
    %v2390 = vld [vmem:[%s11 + $0x4] sm:$0xf]
    %v2391 = vld [vmem:[%s11 + $0x8] sm:$0xf]
    %v2392 = vld [vmem:[%s11 + $0xc] sm:$0xf]
    %v2393 = vld [vmem:[%s11 + $0x10] sm:$0xf]
    %v2394 = vld [vmem:[%s11 + $0x14] sm:$0xf]
    %v2395 = vld [vmem:[%s11 + $0x18] sm:$0xf]
    %v2396 = vld [vmem:[%s11 + $0x1c] sm:$0xf]
    %v2397 = vld [vmem:[%s11 + $0x20] sm:$0xf]
    %v2398 = vld [vmem:[%s11 + $0x24] sm:$0xf]
    %v2399 = vld [vmem:[%s11 + $0x28] sm:$0xf]
    %v2400 = vld [vmem:[%s11 + $0x2c] sm:$0xf]
    %v2401 = vld [vmem:[%s11 + $0x30] sm:$0xf]
    %v2402 = vld [vmem:[%s11 + $0x34] sm:$0xf]
    %v2403 = vld [vmem:[%s11 + $0x38] sm:$0xf]
    %v2404 = vld [vmem:[%s11 + $0x3c] sm:$0xf]
    %v2405 = vld [vmem:[%s12] sm:$0x1]
    %v2407 = vperm.slane %v2405, 0
    %v2425 = vunpack.c.l.b16 %v2389
    %v2426 = vunpack.c.l.b16 %v2390
    %v2427 = vunpack.c.l.b16 %v2391
    %v2428 = vunpack.c.l.b16 %v2392
    %v2429 = vunpack.c.l.b16 %v2393
    %v2430 = vunpack.c.l.b16 %v2394
    %v2431 = vunpack.c.l.b16 %v2395
    %v2432 = vunpack.c.l.b16 %v2396
    %v2433 = vunpack.c.l.b16 %v2397
    %v2434 = vunpack.c.l.b16 %v2398
    %v2435 = vunpack.c.l.b16 %v2399
    %v2436 = vunpack.c.l.b16 %v2400
    %v2437 = vunpack.c.l.b16 %v2401
    %v2438 = vunpack.c.l.b16 %v2402
    %v2439 = vunpack.c.l.b16 %v2403
    %v2440 = vunpack.c.l.b16 %v2404
    %v2441 = vpack.c.b16 %v2426, %v2425
    %v2442 = vpack.c.b16 %v2428, %v2427
    %v2443 = vpack.c.b16 %v2430, %v2429
    %v2444 = vpack.c.b16 %v2432, %v2431
    %v2445 = vpack.c.b16 %v2434, %v2433
    %v2446 = vpack.c.b16 %v2436, %v2435
    %v2447 = vpack.c.b16 %v2438, %v2437
    %v2448 = vpack.c.b16 %v2440, %v2439
    %2457 = vmatpush.bf16.msra.mxu0 %v2448
    %2458 = vmatpush.bf16.msra.mxu0 %v2447
    %2459 = vmatpush.bf16.msra.mxu0 %v2446
    %2460 = vmatpush.bf16.msra.mxu0 %v2445
    %2461 = vmatpush.bf16.msra.mxu0 %v2444
    %2462 = vmatpush.bf16.msra.mxu0 %v2443
    %2463 = vmatpush.bf16.msra.mxu0 %v2442
    %2464 = vmatpush.bf16.msra.mxu0 %v2441
    %2465 = vmatmul.bf16.gmra.mxu0 %v2388
    %v2466 = vpop.f32.mrf.mxu0
    %v2467 = vadd.f32 %v2407, %v2466
    %v2468 = vpop.f32.mrf.mxu0
    %2469 = vdwg.mxu0
    %2470 = vst [vmem:[#allocation5] sm:$0x3] %v2467
    // Predicated region
    $region54: #{lenet5_forward.1} parent=1 // pred_check
      _
    $region55: #{lenet5_forward.1} parent=1 // pred_check_branch
      %2472 = sbr.rel (0) target = $region57
    $region56: #{lenet5_forward.1} parent=1 // pred_region
      %2474 = vsyncadd [#allocation6], 0
      %s2476 = sshll.u32 [#allocation5], 4
      %s2477 = int_to_ptr.vmem [resolvable:$true] %s2476
      %s2478 = sshll.u32 %s13, 4
      %s2479 = int_to_ptr.hbm [resolvable:$true] %s2478
      %2481 = dma.vmem_to_hbm [thread:$0]  %s2477, 32, %s2479, [#allocation6]
    $region57: #{lenet5_forward.1} parent=1 // pred_fallthru
      _
    // Predicated region
    $region58: #{lenet5_forward.1} parent=1 // pred_check
      _
    $region59: #{lenet5_forward.1} parent=1 // pred_check_branch
      %2483 = sbr.rel (0) target = $region61
    $region60: #{lenet5_forward.1} parent=1 // pred_region
      %2485 = dma.done [#allocation6], 32
    $region61: #{lenet5_forward.1} parent=1 // pred_fallthru
      _
    %2486 = vsyncpa [#allocation6], 1

</llo_original>
